<compile_context>
chip_gen: v7x
topology: tpu7x:2x2x1
jax: 0.10.0
libtpu: 0.0.40
codegen_flags: <defaults>
</compile_context>

<pallas_src>
import functools

import jax
import jax.numpy as jnp
import numpy as np
from jax import lax
from jax.experimental import pallas as pl
from jax.experimental.pallas import tpu as pltpu


# ----------------------------------------------------------------------------
# Pallas kernels
# ----------------------------------------------------------------------------
def char_cnn_maxpool_kernel(x_ref, w_ref, b_ref, out_ref, *, n_pos, n_words):
    # x_ref:  ((Lc+4)*N, E) bf16, position-major rows (row = pos*N + n)
    # w_ref:  (3, E, C) bf16, per-tap conv weights: w[k, e, c] = W_torch[c, 0, k, e]
    # b_ref:  (1, C) f32
    # out_ref:(N, C) f32 -- max over conv positions (== max_pool2d) + bias
    N = n_words
    # Fused im2col: three shifted partial GEMMs accumulate into one f32 tensor.
    # Slices start at 0, N, 2N (N is a multiple of 8 -> sublane-tile aligned).
    conv = jnp.dot(x_ref[0:n_pos * N, :], w_ref[0],
                   preferred_element_type=jnp.float32)
    conv = conv + jnp.dot(x_ref[N:(n_pos + 1) * N, :], w_ref[1],
                          preferred_element_type=jnp.float32)
    conv = conv + jnp.dot(x_ref[2 * N:(n_pos + 2) * N, :], w_ref[2],
                          preferred_element_type=jnp.float32)
    # Position max: pure VPU maximum over tile-aligned static slices.
    res = conv[0:N, :]
    for p in range(1, n_pos):                                   # static, small
        res = jnp.maximum(res, conv[p * N:(p + 1) * N, :])
    out_ref[...] = (res + b_ref[...]).astype(out_ref.dtype)     # bias hoisted past max


def bilstm_kernel(x_ref, wi_ref, wh_ref, b_ref, out_ref, sc_ref, tag_ref,
                  *, T, B, H):
    # x_ref:  (T*B, D) bf16 time-major flattened input (row = t*B + b)
    # wi_ref: (D, 8H) bf16  W_ih of both directions, per-gate interleaved columns
    #                       [i_f, i_b, f_f, f_b, g_f, g_b, o_f, o_b]
    # wh_ref: (2H, 8H) bf16 block-diagonal W_hh: [h_f | h_b] @ wh -> same layout
    # b_ref:  (1, 8H) f32   (b_ih + b_hh) per direction, same interleaved layout
    # out_ref:(B, T*2H) f32 lane-dense output; [b, t*2H:(t+1)*2H] = [h_f(t) | h_b(t)]
    # sc_ref: (B, 2H)  f32  torch.max(feats, 1) values
    # tag_ref:(B, 2H)  i32  torch.max(feats, 1) indices
    H2, H4, H6, H8 = 2 * H, 4 * H, 6 * H, 8 * H

    # Hoisted input projection: one MXU GEMM (bf16 operands, f32 acc), bias folded.
    p = jnp.dot(x_ref[...], wi_ref[...],
                preferred_element_type=jnp.float32) + b_ref[...]     # (T*B, 8H)
    wh = wh_ref[...]

    # Hoisted direction select (off the serial h->h chain): forward-direction
    # columns read the projection at time s, backward-direction columns at T-1-s.
    col = lax.broadcasted_iota(jnp.int32, (1, H8), 1)
    fwd_mask = (col % H2) < H
    pre = [jnp.where(fwd_mask,
                     p[s * B:(s + 1) * B, :],
                     p[(T - 1 - s) * B:(T - s) * B, :]) for s in range(T)]

    h = jnp.zeros((B, H2), jnp.float32)   # [h_fwd | h_bwd]
    c = jnp.zeros((B, H2), jnp.float32)   # [c_fwd | c_bwd]
    hs_f = [None] * T
    hs_b = [None] * T

    # Fused, fully-unrolled recurrence: step s advances fwd at time s and bwd at
    # time T-1-s with a single (B,2H)@(2H,8H) matmul.  No stores inside the loop.
    for s in range(T):
        gates = pre[s] + jnp.dot(h.astype(jnp.bfloat16), wh,
                                 preferred_element_type=jnp.float32)   # (B, 8H)
        sg = jax.nn.sigmoid(gates)          # i/f/o from one full-width EUP pass
        g = jnp.tanh(gates[:, H4:H6])       # 128-aligned g block
        c = sg[:, H2:H4] * c + sg[:, 0:H2] * g
        h = sg[:, H6:H8] * jnp.tanh(c)
        hs_f[s] = h[:, :H]
        hs_b[T - 1 - s] = h[:, H:]

    # Single lane-dense bulk store after the loop (replaces 2T masked sub-stores).
    rows = [jnp.concatenate([hs_f[t], hs_b[t]], axis=1) for t in range(T)]  # (B, 2H)
    out_ref[...] = jnp.concatenate(rows, axis=1).astype(out_ref.dtype)      # (B, T*2H)

    # Fused use_crf=False epilogue: torch.max(feats, 1) over the time axis.
    best = rows[0]
    idx = jnp.zeros((B, H2), jnp.int32)
    for t in range(1, T):
        upd = rows[t] > best                # strict '>' -> first-occurrence argmax
        best = jnp.where(upd, rows[t], best)
        idx = jnp.where(upd, jnp.full_like(idx, t), idx)
    sc_ref[...] = best
    tag_ref[...] = idx


# ----------------------------------------------------------------------------
# Wrappers around pallas_call
# ----------------------------------------------------------------------------
_VMEM = pl.BlockSpec(memory_space=pltpu.MemorySpace.VMEM)


def _round_up(x, m):
    return -(-x // m) * m


def char_cnn_maxpool(char_embeds, conv_w, conv_b):
    # char_embeds: (N0, Lc, E) f32; conv_w: (C, 1, 3, E); conv_b: (C,)
    # Returns (N0, Cp) with Cp = C rounded up to 8 (extra channels are exactly 0).
    N0, Lc, E = char_embeds.shape
    C = conv_w.shape[0]
    Cp = _round_up(C, 8)
    n_pos = Lc + 2                                   # (Lc+4) - 3 + 1
    N = _round_up(N0, 8)                             # sublane-align word rows
    x = char_embeds
    if N != N0:
        x = jnp.pad(x, ((0, N - N0), (0, 0), (0, 0)))
    xpad = jnp.pad(x, ((0, 0), (2, 2), (0, 0)))      # (N, Lc+4, E)
    # Position-major 2D layout (row = pos*N + n): the three conv taps become three
    # contiguous, tile-aligned row slices inside the kernel (im2col fused in-kernel).
    x2d = jnp.transpose(xpad, (1, 0, 2)).reshape((Lc + 4) * N, E).astype(jnp.bfloat16)
    w = jnp.transpose(conv_w[:, 0, :, :], (1, 2, 0))                 # (3, E, C)
    w = jnp.pad(w, ((0, 0), (0, 0), (0, Cp - C))).astype(jnp.bfloat16)
    b = jnp.pad(conv_b, (0, Cp - C)).reshape(1, Cp).astype(jnp.float32)
    out = pl.pallas_call(
        functools.partial(char_cnn_maxpool_kernel, n_pos=n_pos, n_words=N),
        out_shape=jax.ShapeDtypeStruct((N, Cp), jnp.float32),
        in_specs=[_VMEM, _VMEM, _VMEM],
        out_specs=_VMEM,
    )(x2d, w, b)
    return out[:N0]


def _interleave_cols(w_f, w_b, H):
    # w_f, w_b: (X, 4H) with PyTorch column gate order [i, f, g, o].
    # Returns (X, 8H) with layout [i_f, i_b, f_f, f_b, g_f, g_b, o_f, o_b].
    parts = []
    for k in range(4):
        parts.append(w_f[:, k * H:(k + 1) * H])
        parts.append(w_b[:, k * H:(k + 1) * H])
    return jnp.concatenate(parts, axis=1)


def _blockdiag_hh(wh_f, wh_b, H):
    # wh_f, wh_b: (H, 4H) = W_hh^T per direction. Returns (2H, 8H) so that
    # [h_f | h_b] @ result reproduces the interleaved per-gate layout above.
    zeros = jnp.zeros((H, H), wh_f.dtype)
    parts = []
    for k in range(4):
        parts.append(jnp.concatenate([wh_f[:, k * H:(k + 1) * H], zeros], axis=0))
        parts.append(jnp.concatenate([zeros, wh_b[:, k * H:(k + 1) * H]], axis=0))
    return jnp.concatenate(parts, axis=1)


def bilstm(x_btd, p):
    # x_btd: (B, T, D) -> returns lstm_out (B, T, 2H), scores (B, 2H), tags (B, 2H).
    B, T, D = x_btd.shape
    H = p["w_hh_f"].shape[1]
    x2d = jnp.transpose(x_btd, (1, 0, 2)).reshape(T * B, D).astype(jnp.bfloat16)

    def pad_in(w):
        # Zero-pad W_ih input columns to match the channel-padded input D.
        return jnp.pad(w, ((0, 0), (0, D - w.shape[1])))

    wi = _interleave_cols(pad_in(p["w_ih_f"]).T, pad_in(p["w_ih_b"]).T,
                          H).astype(jnp.bfloat16)                       # (D, 8H)
    wh = _blockdiag_hh(p["w_hh_f"].T, p["w_hh_b"].T, H).astype(jnp.bfloat16)  # (2H, 8H)
    b = _interleave_cols((p["b_ih_f"] + p["b_hh_f"]).reshape(1, -1),
                         (p["b_ih_b"] + p["b_hh_b"]).reshape(1, -1),
                         H).astype(jnp.float32)                         # (1, 8H)
    out_wide, scores, tags = pl.pallas_call(
        functools.partial(bilstm_kernel, T=T, B=B, H=H),
        out_shape=(jax.ShapeDtypeStruct((B, T * 2 * H), jnp.float32),
                   jax.ShapeDtypeStruct((B, 2 * H), jnp.float32),
                   jax.ShapeDtypeStruct((B, 2 * H), jnp.int32)),
        in_specs=[_VMEM] * 4,
        out_specs=(_VMEM, _VMEM, _VMEM),
    )(x2d, wi, wh, b)
    lstm_out = out_wide.reshape(B, T, 2 * H)          # no transpose needed
    return lstm_out, scores, tags


# ----------------------------------------------------------------------------
# Model: parameter init + forward
# ----------------------------------------------------------------------------
def init_params(key, *, vocab_size, n_chars, embedding_dim, hidden_dim,
                char_embedding_dim, out_channels):
    ks = jax.random.split(key, 12)

    def rnd(k, shape):
        return (jax.random.normal(k, shape) * 0.1).astype(jnp.float32)

    D = embedding_dim + out_channels
    H = hidden_dim
    return dict(
        char_emb=rnd(ks[0], (n_chars, char_embedding_dim)),
        conv_w=rnd(ks[1], (out_channels, 1, 3, char_embedding_dim)),
        conv_b=rnd(ks[2], (out_channels,)),
        word_emb=rnd(ks[3], (vocab_size, embedding_dim)),
        w_ih_f=rnd(ks[4], (4 * H, D)),
        w_hh_f=rnd(ks[5], (4 * H, H)),
        b_ih_f=rnd(ks[6], (4 * H,)),
        b_hh_f=rnd(ks[7], (4 * H,)),
        w_ih_b=rnd(ks[8], (4 * H, D)),
        w_hh_b=rnd(ks[9], (4 * H, H)),
        b_ih_b=rnd(ks[10], (4 * H,)),
        b_hh_b=rnd(ks[11], (4 * H,)),
    )


def bilstm_crf_forward(params, sentence, chars2):
    # sentence: (B, T) int32 word ids
    # chars2:   (B*T, Lc) int32 char ids (one row of chars per word, all words)
    # caps / chars2_length / word_length: unused (n_cap=None, CNN mode,
    #   word_length assumed == T for every sentence -> pack/pad are identity).
    B, T = sentence.shape

    # --- char features: embedding lookup (glue) + fused im2col CNN/max-pool ---
    char_embeds = params["char_emb"][chars2]                         # (B*T, Lc, E)
    chars_feat = char_cnn_maxpool(char_embeds,
                                  params["conv_w"], params["conv_b"])  # (B*T, Cp)
    chars_padd = chars_feat.reshape(B, T, -1)                        # pad_sequence

    # --- word embeddings + concat (glue) ---
    embeds = params["word_emb"][sentence]                            # (B, T, emb)
    embeds = jnp.concatenate([embeds, chars_padd], axis=2)           # (B, T, emb+Cp)
    # nn.Dropout(0.5): identity (inference semantics)

    # --- BiLSTM + fused use_crf=False epilogue (Pallas) ---
    lstm_out, scores, tag_seq = bilstm(embeds, params)               # (B,T,2H),(B,2H),(B,2H)
    # second dropout: identity
    return scores, tag_seq, lstm_out


# ----------------------------------------------------------------------------
# Pure-JAX reference (numeric sanity check of the Pallas kernels)
# ----------------------------------------------------------------------------
def _ref_forward(params, sentence, chars2):
    B, T = sentence.shape
    H = params["w_hh_f"].shape[1]
    char_embeds = params["char_emb"][chars2]
    N, Lc, E = char_embeds.shape
    xpad = jnp.pad(char_embeds, ((0, 0), (2, 2), (0, 0)))
    w = jnp.transpose(params["conv_w"][:, 0, :, :], (1, 2, 0))
    b = params["conv_b"].reshape(1, -1)
    conv = jnp.stack([b + sum(xpad[:, p + k, :] @ w[k] for k in range(3))
                      for p in range(Lc + 2)], axis=1)               # (N, Lc+2, C)
    chars_feat = jnp.max(conv, axis=1)
    embeds = jnp.concatenate(
        [params["word_emb"][sentence], chars_feat.reshape(B, T, -1)], axis=2)
    xs = jnp.transpose(embeds, (1, 0, 2))                            # (T, B, D)

    def run_dir(wi, wh, bias, reverse):
        def step(carry, x_t):
            h, c = carry
            g = x_t @ wi + h @ wh + bias
            i = jax.nn.sigmoid(g[:, :H])
            f = jax.nn.sigmoid(g[:, H:2 * H])
            gg = jnp.tanh(g[:, 2 * H:3 * H])
            o = jax.nn.sigmoid(g[:, 3 * H:])
            c = f * c + i * gg
            h = o * jnp.tanh(c)
            return (h, c), h
        init = (jnp.zeros((B, H), jnp.float32), jnp.zeros((B, H), jnp.float32))
        _, hs = lax.scan(step, init, xs, reverse=reverse)
        return hs

    b_f = (params["b_ih_f"] + params["b_hh_f"]).reshape(1, -1)
    b_b = (params["b_ih_b"] + params["b_hh_b"]).reshape(1, -1)
    out_f = run_dir(params["w_ih_f"].T, params["w_hh_f"].T, b_f, reverse=False)
    out_b = run_dir(params["w_ih_b"].T, params["w_hh_b"].T, b_b, reverse=True)
    lstm_out = jnp.transpose(jnp.concatenate([out_f, out_b], -1), (1, 0, 2))
    return jnp.max(lstm_out, axis=1), lstm_out


# ----------------------------------------------------------------------------
if __name__ == "__main__":
    vocab_size, n_chars = 50, 30
    embedding_dim, hidden_dim = 32, 32
    char_embedding_dim = 25
    out_channels = 25                       # == char_lstm_dim in the module
    B, T, Lc = 2, 8, 12

    key = jax.random.PRNGKey(0)
    kp, k1, k2 = jax.random.split(key, 3)
    params = init_params(kp, vocab_size=vocab_size, n_chars=n_chars,
                         embedding_dim=embedding_dim, hidden_dim=hidden_dim,
                         char_embedding_dim=char_embedding_dim,
                         out_channels=out_channels)

    sentence = jax.random.randint(k1, (B, T), 1, vocab_size, dtype=jnp.int32)
    chars2 = jax.random.randint(k2, (B * T, Lc), 1, n_chars, dtype=jnp.int32)

    fwd = jax.jit(functools.partial(bilstm_crf_forward, params))
    scores, tag_seq, lstm_out = fwd(sentence, chars2)
    jax.block_until_ready((scores, tag_seq, lstm_out))

    ref_scores, ref_lstm_out = _ref_forward(params, sentence, chars2)
    np.testing.assert_allclose(np.asarray(lstm_out), np.asarray(ref_lstm_out),
                               rtol=5e-2, atol=5e-3)
    np.testing.assert_allclose(np.asarray(scores), np.asarray(ref_scores),
                               rtol=5e-2, atol=5e-3)

    print("KERNEL_OK")
</pallas_src>

<mosaic_0001>
module attributes {stable_mosaic.version = 11 : i64} {
  func.func @char_cnn_maxpool_kernel(%arg0: memref<256x25xbf16, #tpu.memory_space<vmem>>, %arg1: memref<3x25x32xbf16, #tpu.memory_space<vmem>>, %arg2: memref<1x32xf32, #tpu.memory_space<vmem>>, %arg3: memref<16x32xf32, #tpu.memory_space<vmem>>) attributes {dimension_semantics = [], scalar_prefetch = 0 : i64, scratch_operands = 0 : i64, tpu.core_type = #tpu.core_type<tc>} {
    %c0 = arith.constant 0 : index
    %c0_0 = arith.constant 0 : index
    %0 = vector.load %arg0[%c0, %c0_0] : memref<256x25xbf16, #tpu.memory_space<vmem>>, vector<224x25xbf16>
    %c0_1 = arith.constant 0 : index
    %c0_2 = arith.constant 0 : index
    %c0_3 = arith.constant 0 : index
    %1 = vector.load %arg1[%c0_1, %c0_2, %c0_3] : memref<3x25x32xbf16, #tpu.memory_space<vmem>>, vector<1x25x32xbf16>
    %2 = vector.shape_cast %1 : vector<1x25x32xbf16> to vector<25x32xbf16>
    %cst = arith.constant dense<0.000000e+00> : vector<224x32xf32>
    %3 = tpu.matmul %0, %2, %cst {dimension_numbers = #tpu.dot_dimension_numbers<[1], [0], [0], [1], [0, 0, 1, 1], [], []>} : vector<224x25xbf16>, vector<25x32xbf16>, vector<224x32xf32> -> vector<224x32xf32>
    %c16 = arith.constant 16 : index
    %c0_4 = arith.constant 0 : index
    %4 = vector.load %arg0[%c16, %c0_4] : memref<256x25xbf16, #tpu.memory_space<vmem>>, vector<224x25xbf16>
    %c1 = arith.constant 1 : index
    %c0_5 = arith.constant 0 : index
    %c0_6 = arith.constant 0 : index
    %5 = vector.load %arg1[%c1, %c0_5, %c0_6] : memref<3x25x32xbf16, #tpu.memory_space<vmem>>, vector<1x25x32xbf16>
    %6 = vector.shape_cast %5 : vector<1x25x32xbf16> to vector<25x32xbf16>
    %cst_7 = arith.constant dense<0.000000e+00> : vector<224x32xf32>
    %7 = tpu.matmul %4, %6, %cst_7 {dimension_numbers = #tpu.dot_dimension_numbers<[1], [0], [0], [1], [0, 0, 1, 1], [], []>} : vector<224x25xbf16>, vector<25x32xbf16>, vector<224x32xf32> -> vector<224x32xf32>
    %8 = arith.addf %3, %7 : vector<224x32xf32>
    %c32 = arith.constant 32 : index
    %c0_8 = arith.constant 0 : index
    %9 = vector.load %arg0[%c32, %c0_8] : memref<256x25xbf16, #tpu.memory_space<vmem>>, vector<224x25xbf16>
    %c2 = arith.constant 2 : index
    %c0_9 = arith.constant 0 : index
    %c0_10 = arith.constant 0 : index
    %10 = vector.load %arg1[%c2, %c0_9, %c0_10] : memref<3x25x32xbf16, #tpu.memory_space<vmem>>, vector<1x25x32xbf16>
    %11 = vector.shape_cast %10 : vector<1x25x32xbf16> to vector<25x32xbf16>
    %cst_11 = arith.constant dense<0.000000e+00> : vector<224x32xf32>
    %12 = tpu.matmul %9, %11, %cst_11 {dimension_numbers = #tpu.dot_dimension_numbers<[1], [0], [0], [1], [0, 0, 1, 1], [], []>} : vector<224x25xbf16>, vector<25x32xbf16>, vector<224x32xf32> -> vector<224x32xf32>
    %13 = arith.addf %8, %12 : vector<224x32xf32>
    %14 = vector.extract_strided_slice %13 {offsets = [0, 0], sizes = [16, 32], strides = [1, 1]} : vector<224x32xf32> to vector<16x32xf32>
    %15 = vector.extract_strided_slice %13 {offsets = [16, 0], sizes = [16, 32], strides = [1, 1]} : vector<224x32xf32> to vector<16x32xf32>
    %16 = arith.maximumf %14, %15 : vector<16x32xf32>
    %17 = vector.extract_strided_slice %13 {offsets = [32, 0], sizes = [16, 32], strides = [1, 1]} : vector<224x32xf32> to vector<16x32xf32>
    %18 = arith.maximumf %16, %17 : vector<16x32xf32>
    %19 = vector.extract_strided_slice %13 {offsets = [48, 0], sizes = [16, 32], strides = [1, 1]} : vector<224x32xf32> to vector<16x32xf32>
    %20 = arith.maximumf %18, %19 : vector<16x32xf32>
    %21 = vector.extract_strided_slice %13 {offsets = [64, 0], sizes = [16, 32], strides = [1, 1]} : vector<224x32xf32> to vector<16x32xf32>
    %22 = arith.maximumf %20, %21 : vector<16x32xf32>
    %23 = vector.extract_strided_slice %13 {offsets = [80, 0], sizes = [16, 32], strides = [1, 1]} : vector<224x32xf32> to vector<16x32xf32>
    %24 = arith.maximumf %22, %23 : vector<16x32xf32>
    %25 = vector.extract_strided_slice %13 {offsets = [96, 0], sizes = [16, 32], strides = [1, 1]} : vector<224x32xf32> to vector<16x32xf32>
    %26 = arith.maximumf %24, %25 : vector<16x32xf32>
    %27 = vector.extract_strided_slice %13 {offsets = [112, 0], sizes = [16, 32], strides = [1, 1]} : vector<224x32xf32> to vector<16x32xf32>
    %28 = arith.maximumf %26, %27 : vector<16x32xf32>
    %29 = vector.extract_strided_slice %13 {offsets = [128, 0], sizes = [16, 32], strides = [1, 1]} : vector<224x32xf32> to vector<16x32xf32>
    %30 = arith.maximumf %28, %29 : vector<16x32xf32>
    %31 = vector.extract_strided_slice %13 {offsets = [144, 0], sizes = [16, 32], strides = [1, 1]} : vector<224x32xf32> to vector<16x32xf32>
    %32 = arith.maximumf %30, %31 : vector<16x32xf32>
    %33 = vector.extract_strided_slice %13 {offsets = [160, 0], sizes = [16, 32], strides = [1, 1]} : vector<224x32xf32> to vector<16x32xf32>
    %34 = arith.maximumf %32, %33 : vector<16x32xf32>
    %35 = vector.extract_strided_slice %13 {offsets = [176, 0], sizes = [16, 32], strides = [1, 1]} : vector<224x32xf32> to vector<16x32xf32>
    %36 = arith.maximumf %34, %35 : vector<16x32xf32>
    %37 = vector.extract_strided_slice %13 {offsets = [192, 0], sizes = [16, 32], strides = [1, 1]} : vector<224x32xf32> to vector<16x32xf32>
    %38 = arith.maximumf %36, %37 : vector<16x32xf32>
    %39 = vector.extract_strided_slice %13 {offsets = [208, 0], sizes = [16, 32], strides = [1, 1]} : vector<224x32xf32> to vector<16x32xf32>
    %40 = arith.maximumf %38, %39 : vector<16x32xf32>
    %c0_12 = arith.constant 0 : index
    %c0_13 = arith.constant 0 : index
    %41 = vector.load %arg2[%c0_12, %c0_13] : memref<1x32xf32, #tpu.memory_space<vmem>>, vector<1x32xf32>
    %42 = vector.broadcast %41 : vector<1x32xf32> to vector<16x32xf32>
    %43 = arith.addf %40, %42 : vector<16x32xf32>
    %c0_14 = arith.constant 0 : index
    %c0_15 = arith.constant 0 : index
    %44 = vector.load %arg3[%c0_14, %c0_15] : memref<16x32xf32, #tpu.memory_space<vmem>>, vector<16x32xf32>
    tpu.vector_store %arg3[%c0_14, %c0_15], %43 {strides = array<i32>} : memref<16x32xf32, #tpu.memory_space<vmem>>, vector<16x32xf32>,
    return
  }
}

module attributes {stable_mosaic.version = 11 : i64} {
  func.func @bilstm_kernel(%arg0: memref<16x64xbf16, #tpu.memory_space<vmem>>, %arg1: memref<64x256xbf16, #tpu.memory_space<vmem>>, %arg2: memref<64x256xbf16, #tpu.memory_space<vmem>>, %arg3: memref<1x256xf32, #tpu.memory_space<vmem>>, %arg4: memref<2x512xf32, #tpu.memory_space<vmem>>, %arg5: memref<2x64xf32, #tpu.memory_space<vmem>>, %arg6: memref<2x64xi32, #tpu.memory_space<vmem>>) attributes {dimension_semantics = [], scalar_prefetch = 0 : i64, scratch_operands = 0 : i64, tpu.core_type = #tpu.core_type<tc>} {
    %c0 = arith.constant 0 : index
    %c0_0 = arith.constant 0 : index
    %0 = vector.load %arg0[%c0, %c0_0] : memref<16x64xbf16, #tpu.memory_space<vmem>>, vector<16x64xbf16>
    %c0_1 = arith.constant 0 : index
    %c0_2 = arith.constant 0 : index
    %1 = vector.load %arg1[%c0_1, %c0_2] : memref<64x256xbf16, #tpu.memory_space<vmem>>, vector<64x256xbf16>
    %cst = arith.constant dense<0.000000e+00> : vector<16x256xf32>
    %2 = tpu.matmul %0, %1, %cst {dimension_numbers = #tpu.dot_dimension_numbers<[1], [0], [0], [1], [0, 0, 1, 1], [], []>} : vector<16x64xbf16>, vector<64x256xbf16>, vector<16x256xf32> -> vector<16x256xf32>
    %c0_3 = arith.constant 0 : index
    %c0_4 = arith.constant 0 : index
    %3 = vector.load %arg3[%c0_3, %c0_4] : memref<1x256xf32, #tpu.memory_space<vmem>>, vector<1x256xf32>
    %4 = vector.broadcast %3 : vector<1x256xf32> to vector<16x256xf32>
    %5 = arith.addf %2, %4 : vector<16x256xf32>
    %c0_5 = arith.constant 0 : index
    %c0_6 = arith.constant 0 : index
    %6 = vector.load %arg2[%c0_5, %c0_6] : memref<64x256xbf16, #tpu.memory_space<vmem>>, vector<64x256xbf16>
    %7 = tpu.iota {dimensions = array<i32: 1>} : vector<1x256xi32>
    %c64_i32 = arith.constant 64 : i32
    %c0_i32 = arith.constant 0 : i32
    %8 = arith.cmpi eq, %c64_i32, %c0_i32 : i32
    %c1_i32 = arith.constant 1 : i32
    %9 = arith.select %8, %c1_i32, %c64_i32 : i32
    %10 = vector.broadcast %9 : i32 to vector<1x256xi32>
    %11 = arith.remsi %7, %10 : vector<1x256xi32>
    %c0_i32_7 = arith.constant 0 : i32
    %12 = vector.broadcast %c0_i32_7 : i32 to vector<1x256xi32>
    %13 = arith.cmpi ne, %11, %12 : vector<1x256xi32>
    %c0_i32_8 = arith.constant 0 : i32
    %14 = vector.broadcast %c0_i32_8 : i32 to vector<1x256xi32>
    %15 = arith.cmpi slt, %11, %14 : vector<1x256xi32>
    %c0_i32_9 = arith.constant 0 : i32
    %16 = arith.cmpi slt, %9, %c0_i32_9 : i32
    %17 = vector.broadcast %16 : i1 to vector<1x256xi1>
    %18 = vector.broadcast %17 : vector<1x256xi1> to vector<1x256xi1>
    %19 = arith.xori %15, %18 : vector<1x256xi1>
    %20 = arith.andi %19, %13 : vector<1x256xi1>
    %21 = vector.broadcast %9 : i32 to vector<1x256xi32>
    %22 = arith.addi %11, %21 : vector<1x256xi32>
    %23 = arith.select %20, %22, %11 : vector<1x256xi1>, vector<1x256xi32>
    %c32_i32 = arith.constant 32 : i32
    %24 = vector.broadcast %c32_i32 : i32 to vector<1x256xi32>
    %25 = arith.cmpi slt, %23, %24 : vector<1x256xi32>
    %26 = vector.extract_strided_slice %5 {offsets = [0, 0], sizes = [2, 256], strides = [1, 1]} : vector<16x256xf32> to vector<2x256xf32>
    %27 = vector.extract_strided_slice %5 {offsets = [14, 0], sizes = [2, 256], strides = [1, 1]} : vector<16x256xf32> to vector<2x256xf32>
    %28 = vector.shape_cast %25 : vector<1x256xi1> to vector<1x256xi1>
    %29 = vector.broadcast %28 : vector<1x256xi1> to vector<2x256xi1>
    %30 = arith.select %29, %26, %27 : vector<2x256xi1>, vector<2x256xf32>
    %31 = vector.extract_strided_slice %5 {offsets = [2, 0], sizes = [2, 256], strides = [1, 1]} : vector<16x256xf32> to vector<2x256xf32>
    %32 = vector.extract_strided_slice %5 {offsets = [12, 0], sizes = [2, 256], strides = [1, 1]} : vector<16x256xf32> to vector<2x256xf32>
    %33 = vector.shape_cast %25 : vector<1x256xi1> to vector<1x256xi1>
    %34 = vector.broadcast %33 : vector<1x256xi1> to vector<2x256xi1>
    %35 = arith.select %34, %31, %32 : vector<2x256xi1>, vector<2x256xf32>
    %36 = vector.extract_strided_slice %5 {offsets = [4, 0], sizes = [2, 256], strides = [1, 1]} : vector<16x256xf32> to vector<2x256xf32>
    %37 = vector.extract_strided_slice %5 {offsets = [10, 0], sizes = [2, 256], strides = [1, 1]} : vector<16x256xf32> to vector<2x256xf32>
    %38 = vector.shape_cast %25 : vector<1x256xi1> to vector<1x256xi1>
    %39 = vector.broadcast %38 : vector<1x256xi1> to vector<2x256xi1>
    %40 = arith.select %39, %36, %37 : vector<2x256xi1>, vector<2x256xf32>
    %41 = vector.extract_strided_slice %5 {offsets = [6, 0], sizes = [2, 256], strides = [1, 1]} : vector<16x256xf32> to vector<2x256xf32>
    %42 = vector.extract_strided_slice %5 {offsets = [8, 0], sizes = [2, 256], strides = [1, 1]} : vector<16x256xf32> to vector<2x256xf32>
    %43 = vector.shape_cast %25 : vector<1x256xi1> to vector<1x256xi1>
    %44 = vector.broadcast %43 : vector<1x256xi1> to vector<2x256xi1>
    %45 = arith.select %44, %41, %42 : vector<2x256xi1>, vector<2x256xf32>
    %46 = vector.extract_strided_slice %5 {offsets = [8, 0], sizes = [2, 256], strides = [1, 1]} : vector<16x256xf32> to vector<2x256xf32>
    %47 = vector.extract_strided_slice %5 {offsets = [6, 0], sizes = [2, 256], strides = [1, 1]} : vector<16x256xf32> to vector<2x256xf32>
    %48 = vector.shape_cast %25 : vector<1x256xi1> to vector<1x256xi1>
    %49 = vector.broadcast %48 : vector<1x256xi1> to vector<2x256xi1>
    %50 = arith.select %49, %46, %47 : vector<2x256xi1>, vector<2x256xf32>
    %51 = vector.extract_strided_slice %5 {offsets = [10, 0], sizes = [2, 256], strides = [1, 1]} : vector<16x256xf32> to vector<2x256xf32>
    %52 = vector.extract_strided_slice %5 {offsets = [4, 0], sizes = [2, 256], strides = [1, 1]} : vector<16x256xf32> to vector<2x256xf32>
    %53 = vector.shape_cast %25 : vector<1x256xi1> to vector<1x256xi1>
    %54 = vector.broadcast %53 : vector<1x256xi1> to vector<2x256xi1>
    %55 = arith.select %54, %51, %52 : vector<2x256xi1>, vector<2x256xf32>
    %56 = vector.extract_strided_slice %5 {offsets = [12, 0], sizes = [2, 256], strides = [1, 1]} : vector<16x256xf32> to vector<2x256xf32>
    %57 = vector.extract_strided_slice %5 {offsets = [2, 0], sizes = [2, 256], strides = [1, 1]} : vector<16x256xf32> to vector<2x256xf32>
    %58 = vector.shape_cast %25 : vector<1x256xi1> to vector<1x256xi1>
    %59 = vector.broadcast %58 : vector<1x256xi1> to vector<2x256xi1>
    %60 = arith.select %59, %56, %57 : vector<2x256xi1>, vector<2x256xf32>
    %61 = vector.extract_strided_slice %5 {offsets = [14, 0], sizes = [2, 256], strides = [1, 1]} : vector<16x256xf32> to vector<2x256xf32>
    %62 = vector.extract_strided_slice %5 {offsets = [0, 0], sizes = [2, 256], strides = [1, 1]} : vector<16x256xf32> to vector<2x256xf32>
    %63 = vector.shape_cast %25 : vector<1x256xi1> to vector<1x256xi1>
    %64 = vector.broadcast %63 : vector<1x256xi1> to vector<2x256xi1>
    %65 = arith.select %64, %61, %62 : vector<2x256xi1>, vector<2x256xf32>
    %cst_10 = arith.constant 0.000000e+00 : f32
    %66 = vector.broadcast %cst_10 : f32 to vector<2x64xf32>
    %cst_11 = arith.constant 0.000000e+00 : f32
    %67 = vector.broadcast %cst_11 : f32 to vector<2x64xf32>
    %68 = arith.truncf %66 : vector<2x64xf32> to vector<2x64xbf16>
    %cst_12 = arith.constant dense<0.000000e+00> : vector<2x256xf32>
    %69 = tpu.matmul %68, %6, %cst_12 {dimension_numbers = #tpu.dot_dimension_numbers<[1], [0], [0], [1], [0, 0, 1, 1], [], []>} : vector<2x64xbf16>, vector<64x256xbf16>, vector<2x256xf32> -> vector<2x256xf32>
    %70 = arith.addf %30, %69 : vector<2x256xf32>
    %71 = arith.negf %70 : vector<2x256xf32>
    %72 = math.exp %71 : vector<2x256xf32>
    %cst_13 = arith.constant 1.000000e+00 : f32
    %73 = vector.broadcast %cst_13 : f32 to vector<2x256xf32>
    %74 = arith.addf %73, %72 : vector<2x256xf32>
    %75 = arith.divf %73, %74 : vector<2x256xf32>
    %76 = vector.extract_strided_slice %70 {offsets = [0, 128], sizes = [2, 64], strides = [1, 1]} : vector<2x256xf32> to vector<2x64xf32>
    %77 = math.tanh %76 : vector<2x64xf32>
    %78 = vector.extract_strided_slice %75 {offsets = [0, 64], sizes = [2, 64], strides = [1, 1]} : vector<2x256xf32> to vector<2x64xf32>
    %79 = arith.mulf %78, %67 : vector<2x64xf32>
    %80 = vector.extract_strided_slice %75 {offsets = [0, 0], sizes = [2, 64], strides = [1, 1]} : vector<2x256xf32> to vector<2x64xf32>
    %81 = arith.mulf %80, %77 : vector<2x64xf32>
    %82 = arith.addf %79, %81 : vector<2x64xf32>
    %83 = vector.extract_strided_slice %75 {offsets = [0, 192], sizes = [2, 64], strides = [1, 1]} : vector<2x256xf32> to vector<2x64xf32>
    %84 = math.tanh %82 : vector<2x64xf32>
    %85 = arith.mulf %83, %84 : vector<2x64xf32>
    %86 = vector.extract_strided_slice %85 {offsets = [0, 0], sizes = [2, 32], strides = [1, 1]} : vector<2x64xf32> to vector<2x32xf32>
    %87 = vector.extract_strided_slice %85 {offsets = [0, 32], sizes = [2, 32], strides = [1, 1]} : vector<2x64xf32> to vector<2x32xf32>
    %88 = arith.truncf %85 : vector<2x64xf32> to vector<2x64xbf16>
    %cst_14 = arith.constant dense<0.000000e+00> : vector<2x256xf32>
    %89 = tpu.matmul %88, %6, %cst_14 {dimension_numbers = #tpu.dot_dimension_numbers<[1], [0], [0], [1], [0, 0, 1, 1], [], []>} : vector<2x64xbf16>, vector<64x256xbf16>, vector<2x256xf32> -> vector<2x256xf32>
    %90 = arith.addf %35, %89 : vector<2x256xf32>
    %91 = arith.negf %90 : vector<2x256xf32>
    %92 = math.exp %91 : vector<2x256xf32>
    %cst_15 = arith.constant 1.000000e+00 : f32
    %93 = vector.broadcast %cst_15 : f32 to vector<2x256xf32>
    %94 = arith.addf %93, %92 : vector<2x256xf32>
    %95 = arith.divf %93, %94 : vector<2x256xf32>
    %96 = vector.extract_strided_slice %90 {offsets = [0, 128], sizes = [2, 64], strides = [1, 1]} : vector<2x256xf32> to vector<2x64xf32>
    %97 = math.tanh %96 : vector<2x64xf32>
    %98 = vector.extract_strided_slice %95 {offsets = [0, 64], sizes = [2, 64], strides = [1, 1]} : vector<2x256xf32> to vector<2x64xf32>
    %99 = arith.mulf %98, %82 : vector<2x64xf32>
    %100 = vector.extract_strided_slice %95 {offsets = [0, 0], sizes = [2, 64], strides = [1, 1]} : vector<2x256xf32> to vector<2x64xf32>
    %101 = arith.mulf %100, %97 : vector<2x64xf32>
    %102 = arith.addf %99, %101 : vector<2x64xf32>
    %103 = vector.extract_strided_slice %95 {offsets = [0, 192], sizes = [2, 64], strides = [1, 1]} : vector<2x256xf32> to vector<2x64xf32>
    %104 = math.tanh %102 : vector<2x64xf32>
    %105 = arith.mulf %103, %104 : vector<2x64xf32>
    %106 = vector.extract_strided_slice %105 {offsets = [0, 0], sizes = [2, 32], strides = [1, 1]} : vector<2x64xf32> to vector<2x32xf32>
    %107 = vector.extract_strided_slice %105 {offsets = [0, 32], sizes = [2, 32], strides = [1, 1]} : vector<2x64xf32> to vector<2x32xf32>
    %108 = arith.truncf %105 : vector<2x64xf32> to vector<2x64xbf16>
    %cst_16 = arith.constant dense<0.000000e+00> : vector<2x256xf32>
    %109 = tpu.matmul %108, %6, %cst_16 {dimension_numbers = #tpu.dot_dimension_numbers<[1], [0], [0], [1], [0, 0, 1, 1], [], []>} : vector<2x64xbf16>, vector<64x256xbf16>, vector<2x256xf32> -> vector<2x256xf32>
    %110 = arith.addf %40, %109 : vector<2x256xf32>
    %111 = arith.negf %110 : vector<2x256xf32>
    %112 = math.exp %111 : vector<2x256xf32>
    %cst_17 = arith.constant 1.000000e+00 : f32
    %113 = vector.broadcast %cst_17 : f32 to vector<2x256xf32>
    %114 = arith.addf %113, %112 : vector<2x256xf32>
    %115 = arith.divf %113, %114 : vector<2x256xf32>
    %116 = vector.extract_strided_slice %110 {offsets = [0, 128], sizes = [2, 64], strides = [1, 1]} : vector<2x256xf32> to vector<2x64xf32>
    %117 = math.tanh %116 : vector<2x64xf32>
    %118 = vector.extract_strided_slice %115 {offsets = [0, 64], sizes = [2, 64], strides = [1, 1]} : vector<2x256xf32> to vector<2x64xf32>
    %119 = arith.mulf %118, %102 : vector<2x64xf32>
    %120 = vector.extract_strided_slice %115 {offsets = [0, 0], sizes = [2, 64], strides = [1, 1]} : vector<2x256xf32> to vector<2x64xf32>
    %121 = arith.mulf %120, %117 : vector<2x64xf32>
    %122 = arith.addf %119, %121 : vector<2x64xf32>
    %123 = vector.extract_strided_slice %115 {offsets = [0, 192], sizes = [2, 64], strides = [1, 1]} : vector<2x256xf32> to vector<2x64xf32>
    %124 = math.tanh %122 : vector<2x64xf32>
    %125 = arith.mulf %123, %124 : vector<2x64xf32>
    %126 = vector.extract_strided_slice %125 {offsets = [0, 0], sizes = [2, 32], strides = [1, 1]} : vector<2x64xf32> to vector<2x32xf32>
    %127 = vector.extract_strided_slice %125 {offsets = [0, 32], sizes = [2, 32], strides = [1, 1]} : vector<2x64xf32> to vector<2x32xf32>
    %128 = arith.truncf %125 : vector<2x64xf32> to vector<2x64xbf16>
    %cst_18 = arith.constant dense<0.000000e+00> : vector<2x256xf32>
    %129 = tpu.matmul %128, %6, %cst_18 {dimension_numbers = #tpu.dot_dimension_numbers<[1], [0], [0], [1], [0, 0, 1, 1], [], []>} : vector<2x64xbf16>, vector<64x256xbf16>, vector<2x256xf32> -> vector<2x256xf32>
    %130 = arith.addf %45, %129 : vector<2x256xf32>
    %131 = arith.negf %130 : vector<2x256xf32>
    %132 = math.exp %131 : vector<2x256xf32>
    %cst_19 = arith.constant 1.000000e+00 : f32
    %133 = vector.broadcast %cst_19 : f32 to vector<2x256xf32>
    %134 = arith.addf %133, %132 : vector<2x256xf32>
    %135 = arith.divf %133, %134 : vector<2x256xf32>
    %136 = vector.extract_strided_slice %130 {offsets = [0, 128], sizes = [2, 64], strides = [1, 1]} : vector<2x256xf32> to vector<2x64xf32>
    %137 = math.tanh %136 : vector<2x64xf32>
    %138 = vector.extract_strided_slice %135 {offsets = [0, 64], sizes = [2, 64], strides = [1, 1]} : vector<2x256xf32> to vector<2x64xf32>
    %139 = arith.mulf %138, %122 : vector<2x64xf32>
    %140 = vector.extract_strided_slice %135 {offsets = [0, 0], sizes = [2, 64], strides = [1, 1]} : vector<2x256xf32> to vector<2x64xf32>
    %141 = arith.mulf %140, %137 : vector<2x64xf32>
    %142 = arith.addf %139, %141 : vector<2x64xf32>
    %143 = vector.extract_strided_slice %135 {offsets = [0, 192], sizes = [2, 64], strides = [1, 1]} : vector<2x256xf32> to vector<2x64xf32>
    %144 = math.tanh %142 : vector<2x64xf32>
    %145 = arith.mulf %143, %144 : vector<2x64xf32>
    %146 = vector.extract_strided_slice %145 {offsets = [0, 0], sizes = [2, 32], strides = [1, 1]} : vector<2x64xf32> to vector<2x32xf32>
    %147 = vector.extract_strided_slice %145 {offsets = [0, 32], sizes = [2, 32], strides = [1, 1]} : vector<2x64xf32> to vector<2x32xf32>
    %148 = arith.truncf %145 : vector<2x64xf32> to vector<2x64xbf16>
    %cst_20 = arith.constant dense<0.000000e+00> : vector<2x256xf32>
    %149 = tpu.matmul %148, %6, %cst_20 {dimension_numbers = #tpu.dot_dimension_numbers<[1], [0], [0], [1], [0, 0, 1, 1], [], []>} : vector<2x64xbf16>, vector<64x256xbf16>, vector<2x256xf32> -> vector<2x256xf32>
    %150 = arith.addf %50, %149 : vector<2x256xf32>
    %151 = arith.negf %150 : vector<2x256xf32>
    %152 = math.exp %151 : vector<2x256xf32>
    %cst_21 = arith.constant 1.000000e+00 : f32
    %153 = vector.broadcast %cst_21 : f32 to vector<2x256xf32>
    %154 = arith.addf %153, %152 : vector<2x256xf32>
    %155 = arith.divf %153, %154 : vector<2x256xf32>
    %156 = vector.extract_strided_slice %150 {offsets = [0, 128], sizes = [2, 64], strides = [1, 1]} : vector<2x256xf32> to vector<2x64xf32>
    %157 = math.tanh %156 : vector<2x64xf32>
    %158 = vector.extract_strided_slice %155 {offsets = [0, 64], sizes = [2, 64], strides = [1, 1]} : vector<2x256xf32> to vector<2x64xf32>
    %159 = arith.mulf %158, %142 : vector<2x64xf32>
    %160 = vector.extract_strided_slice %155 {offsets = [0, 0], sizes = [2, 64], strides = [1, 1]} : vector<2x256xf32> to vector<2x64xf32>
    %161 = arith.mulf %160, %157 : vector<2x64xf32>
    %162 = arith.addf %159, %161 : vector<2x64xf32>
    %163 = vector.extract_strided_slice %155 {offsets = [0, 192], sizes = [2, 64], strides = [1, 1]} : vector<2x256xf32> to vector<2x64xf32>
    %164 = math.tanh %162 : vector<2x64xf32>
    %165 = arith.mulf %163, %164 : vector<2x64xf32>
    %166 = vector.extract_strided_slice %165 {offsets = [0, 0], sizes = [2, 32], strides = [1, 1]} : vector<2x64xf32> to vector<2x32xf32>
    %167 = vector.extract_strided_slice %165 {offsets = [0, 32], sizes = [2, 32], strides = [1, 1]} : vector<2x64xf32> to vector<2x32xf32>
    %168 = arith.truncf %165 : vector<2x64xf32> to vector<2x64xbf16>
    %cst_22 = arith.constant dense<0.000000e+00> : vector<2x256xf32>
    %169 = tpu.matmul %168, %6, %cst_22 {dimension_numbers = #tpu.dot_dimension_numbers<[1], [0], [0], [1], [0, 0, 1, 1], [], []>} : vector<2x64xbf16>, vector<64x256xbf16>, vector<2x256xf32> -> vector<2x256xf32>
    %170 = arith.addf %55, %169 : vector<2x256xf32>
    %171 = arith.negf %170 : vector<2x256xf32>
    %172 = math.exp %171 : vector<2x256xf32>
    %cst_23 = arith.constant 1.000000e+00 : f32
    %173 = vector.broadcast %cst_23 : f32 to vector<2x256xf32>
    %174 = arith.addf %173, %172 : vector<2x256xf32>
    %175 = arith.divf %173, %174 : vector<2x256xf32>
    %176 = vector.extract_strided_slice %170 {offsets = [0, 128], sizes = [2, 64], strides = [1, 1]} : vector<2x256xf32> to vector<2x64xf32>
    %177 = math.tanh %176 : vector<2x64xf32>
    %178 = vector.extract_strided_slice %175 {offsets = [0, 64], sizes = [2, 64], strides = [1, 1]} : vector<2x256xf32> to vector<2x64xf32>
    %179 = arith.mulf %178, %162 : vector<2x64xf32>
    %180 = vector.extract_strided_slice %175 {offsets = [0, 0], sizes = [2, 64], strides = [1, 1]} : vector<2x256xf32> to vector<2x64xf32>
    %181 = arith.mulf %180, %177 : vector<2x64xf32>
    %182 = arith.addf %179, %181 : vector<2x64xf32>
    %183 = vector.extract_strided_slice %175 {offsets = [0, 192], sizes = [2, 64], strides = [1, 1]} : vector<2x256xf32> to vector<2x64xf32>
    %184 = math.tanh %182 : vector<2x64xf32>
    %185 = arith.mulf %183, %184 : vector<2x64xf32>
    %186 = vector.extract_strided_slice %185 {offsets = [0, 0], sizes = [2, 32], strides = [1, 1]} : vector<2x64xf32> to vector<2x32xf32>
    %187 = vector.extract_strided_slice %185 {offsets = [0, 32], sizes = [2, 32], strides = [1, 1]} : vector<2x64xf32> to vector<2x32xf32>
    %188 = arith.truncf %185 : vector<2x64xf32> to vector<2x64xbf16>
    %cst_24 = arith.constant dense<0.000000e+00> : vector<2x256xf32>
    %189 = tpu.matmul %188, %6, %cst_24 {dimension_numbers = #tpu.dot_dimension_numbers<[1], [0], [0], [1], [0, 0, 1, 1], [], []>} : vector<2x64xbf16>, vector<64x256xbf16>, vector<2x256xf32> -> vector<2x256xf32>
    %190 = arith.addf %60, %189 : vector<2x256xf32>
    %191 = arith.negf %190 : vector<2x256xf32>
    %192 = math.exp %191 : vector<2x256xf32>
    %cst_25 = arith.constant 1.000000e+00 : f32
    %193 = vector.broadcast %cst_25 : f32 to vector<2x256xf32>
    %194 = arith.addf %193, %192 : vector<2x256xf32>
    %195 = arith.divf %193, %194 : vector<2x256xf32>
    %196 = vector.extract_strided_slice %190 {offsets = [0, 128], sizes = [2, 64], strides = [1, 1]} : vector<2x256xf32> to vector<2x64xf32>
    %197 = math.tanh %196 : vector<2x64xf32>
    %198 = vector.extract_strided_slice %195 {offsets = [0, 64], sizes = [2, 64], strides = [1, 1]} : vector<2x256xf32> to vector<2x64xf32>
    %199 = arith.mulf %198, %182 : vector<2x64xf32>
    %200 = vector.extract_strided_slice %195 {offsets = [0, 0], sizes = [2, 64], strides = [1, 1]} : vector<2x256xf32> to vector<2x64xf32>
    %201 = arith.mulf %200, %197 : vector<2x64xf32>
    %202 = arith.addf %199, %201 : vector<2x64xf32>
    %203 = vector.extract_strided_slice %195 {offsets = [0, 192], sizes = [2, 64], strides = [1, 1]} : vector<2x256xf32> to vector<2x64xf32>
    %204 = math.tanh %202 : vector<2x64xf32>
    %205 = arith.mulf %203, %204 : vector<2x64xf32>
    %206 = vector.extract_strided_slice %205 {offsets = [0, 0], sizes = [2, 32], strides = [1, 1]} : vector<2x64xf32> to vector<2x32xf32>
    %207 = vector.extract_strided_slice %205 {offsets = [0, 32], sizes = [2, 32], strides = [1, 1]} : vector<2x64xf32> to vector<2x32xf32>
    %208 = arith.truncf %205 : vector<2x64xf32> to vector<2x64xbf16>
    %cst_26 = arith.constant dense<0.000000e+00> : vector<2x256xf32>
    %209 = tpu.matmul %208, %6, %cst_26 {dimension_numbers = #tpu.dot_dimension_numbers<[1], [0], [0], [1], [0, 0, 1, 1], [], []>} : vector<2x64xbf16>, vector<64x256xbf16>, vector<2x256xf32> -> vector<2x256xf32>
    %210 = arith.addf %65, %209 : vector<2x256xf32>
    %211 = arith.negf %210 : vector<2x256xf32>
    %212 = math.exp %211 : vector<2x256xf32>
    %cst_27 = arith.constant 1.000000e+00 : f32
    %213 = vector.broadcast %cst_27 : f32 to vector<2x256xf32>
    %214 = arith.addf %213, %212 : vector<2x256xf32>
    %215 = arith.divf %213, %214 : vector<2x256xf32>
    %216 = vector.extract_strided_slice %210 {offsets = [0, 128], sizes = [2, 64], strides = [1, 1]} : vector<2x256xf32> to vector<2x64xf32>
    %217 = math.tanh %216 : vector<2x64xf32>
    %218 = vector.extract_strided_slice %215 {offsets = [0, 64], sizes = [2, 64], strides = [1, 1]} : vector<2x256xf32> to vector<2x64xf32>
    %219 = arith.mulf %218, %202 : vector<2x64xf32>
    %220 = vector.extract_strided_slice %215 {offsets = [0, 0], sizes = [2, 64], strides = [1, 1]} : vector<2x256xf32> to vector<2x64xf32>
    %221 = arith.mulf %220, %217 : vector<2x64xf32>
    %222 = arith.addf %219, %221 : vector<2x64xf32>
    %223 = vector.extract_strided_slice %215 {offsets = [0, 192], sizes = [2, 64], strides = [1, 1]} : vector<2x256xf32> to vector<2x64xf32>
    %224 = math.tanh %222 : vector<2x64xf32>
    %225 = arith.mulf %223, %224 : vector<2x64xf32>
    %226 = vector.extract_strided_slice %225 {offsets = [0, 0], sizes = [2, 32], strides = [1, 1]} : vector<2x64xf32> to vector<2x32xf32>
    %227 = vector.extract_strided_slice %225 {offsets = [0, 32], sizes = [2, 32], strides = [1, 1]} : vector<2x64xf32> to vector<2x32xf32>
    %228 = tpu.concatenate %86, %227 in 1 : vector<2x32xf32>, vector<2x32xf32> -> vector<2x64xf32>
    %229 = tpu.concatenate %106, %207 in 1 : vector<2x32xf32>, vector<2x32xf32> -> vector<2x64xf32>
    %230 = tpu.concatenate %126, %187 in 1 : vector<2x32xf32>, vector<2x32xf32> -> vector<2x64xf32>
    %231 = tpu.concatenate %146, %167 in 1 : vector<2x32xf32>, vector<2x32xf32> -> vector<2x64xf32>
    %232 = tpu.concatenate %166, %147 in 1 : vector<2x32xf32>, vector<2x32xf32> -> vector<2x64xf32>
    %233 = tpu.concatenate %186, %127 in 1 : vector<2x32xf32>, vector<2x32xf32> -> vector<2x64xf32>
    %234 = tpu.concatenate %206, %107 in 1 : vector<2x32xf32>, vector<2x32xf32> -> vector<2x64xf32>
    %235 = tpu.concatenate %226, %87 in 1 : vector<2x32xf32>, vector<2x32xf32> -> vector<2x64xf32>
    %236 = tpu.concatenate %228, %229, %230, %231, %232, %233, %234, %235 in 1 : vector<2x64xf32>, vector<2x64xf32>, vector<2x64xf32>, vector<2x64xf32>, vector<2x64xf32>, vector<2x64xf32>, vector<2x64xf32>, vector<2x64xf32> -> vector<2x512xf32>
    %c0_28 = arith.constant 0 : index
    %c0_29 = arith.constant 0 : index
    %237 = vector.load %arg4[%c0_28, %c0_29] : memref<2x512xf32, #tpu.memory_space<vmem>>, vector<2x512xf32>
    tpu.vector_store %arg4[%c0_28, %c0_29], %236 {strides = array<i32>} : memref<2x512xf32, #tpu.memory_space<vmem>>, vector<2x512xf32>,
    %c0_i32_30 = arith.constant 0 : i32
    %238 = vector.broadcast %c0_i32_30 : i32 to vector<2x64xi32>
    %239 = arith.cmpf ogt, %229, %228 : vector<2x64xf32>
    %240 = arith.select %239, %229, %228 : vector<2x64xi1>, vector<2x64xf32>
    %c1_i32_31 = arith.constant 1 : i32
    %241 = vector.broadcast %c1_i32_31 : i32 to vector<2x64xi32>
    %242 = arith.select %239, %241, %238 : vector<2x64xi1>, vector<2x64xi32>
    %243 = arith.cmpf ogt, %230, %240 : vector<2x64xf32>
    %244 = arith.select %243, %230, %240 : vector<2x64xi1>, vector<2x64xf32>
    %c2_i32 = arith.constant 2 : i32
    %245 = vector.broadcast %c2_i32 : i32 to vector<2x64xi32>
    %246 = arith.select %243, %245, %242 : vector<2x64xi1>, vector<2x64xi32>
    %247 = arith.cmpf ogt, %231, %244 : vector<2x64xf32>
    %248 = arith.select %247, %231, %244 : vector<2x64xi1>, vector<2x64xf32>
    %c3_i32 = arith.constant 3 : i32
    %249 = vector.broadcast %c3_i32 : i32 to vector<2x64xi32>
    %250 = arith.select %247, %249, %246 : vector<2x64xi1>, vector<2x64xi32>
    %251 = arith.cmpf ogt, %232, %248 : vector<2x64xf32>
    %252 = arith.select %251, %232, %248 : vector<2x64xi1>, vector<2x64xf32>
    %c4_i32 = arith.constant 4 : i32
    %253 = vector.broadcast %c4_i32 : i32 to vector<2x64xi32>
    %254 = arith.select %251, %253, %250 : vector<2x64xi1>, vector<2x64xi32>
    %255 = arith.cmpf ogt, %233, %252 : vector<2x64xf32>
    %256 = arith.select %255, %233, %252 : vector<2x64xi1>, vector<2x64xf32>
    %c5_i32 = arith.constant 5 : i32
    %257 = vector.broadcast %c5_i32 : i32 to vector<2x64xi32>
    %258 = arith.select %255, %257, %254 : vector<2x64xi1>, vector<2x64xi32>
    %259 = arith.cmpf ogt, %234, %256 : vector<2x64xf32>
    %260 = arith.select %259, %234, %256 : vector<2x64xi1>, vector<2x64xf32>
    %c6_i32 = arith.constant 6 : i32
    %261 = vector.broadcast %c6_i32 : i32 to vector<2x64xi32>
    %262 = arith.select %259, %261, %258 : vector<2x64xi1>, vector<2x64xi32>
    %263 = arith.cmpf ogt, %235, %260 : vector<2x64xf32>
    %264 = arith.select %263, %235, %260 : vector<2x64xi1>, vector<2x64xf32>
    %c7_i32 = arith.constant 7 : i32
    %265 = vector.broadcast %c7_i32 : i32 to vector<2x64xi32>
    %266 = arith.select %263, %265, %262 : vector<2x64xi1>, vector<2x64xi32>
    %c0_32 = arith.constant 0 : index
    %c0_33 = arith.constant 0 : index
    %267 = vector.load %arg5[%c0_32, %c0_33] : memref<2x64xf32, #tpu.memory_space<vmem>>, vector<2x64xf32>
    tpu.vector_store %arg5[%c0_32, %c0_33], %264 {strides = array<i32>} : memref<2x64xf32, #tpu.memory_space<vmem>>, vector<2x64xf32>,
    %c0_34 = arith.constant 0 : index
    %c0_35 = arith.constant 0 : index
    %268 = vector.load %arg6[%c0_34, %c0_35] : memref<2x64xi32, #tpu.memory_space<vmem>>, vector<2x64xi32>
    tpu.vector_store %arg6[%c0_34, %c0_35], %266 {strides = array<i32>} : memref<2x64xi32, #tpu.memory_space<vmem>>, vector<2x64xi32>,
    return
  }
}

</mosaic_0001>

<llo_original>
// kernel: bilstm_crf_forward.2
$region0: #{bilstm_crf_forward.2}
  #allocation0 [shape = 'u32[]', space=smem, size = 0x4, offset = 0x4, fixed_abs, tag = 'smem constant byte address 0x4 - core index']
  #allocation1 [shape = 'u32[144,128]{1,0:T(1,128)}', space=vmem, size = 0x12000, scoped, tag = 'internal scratch']
  %s0 = inlined_call_operand.vmem [shape: bf16[256,25], index: 0, kind: input, shape index: {}]
  %s1 = inlined_call_operand.vmem [shape: bf16[3,25,32], index: 1, kind: input, shape index: {}]
  %s2 = inlined_call_operand.vmem [shape: f32[1,32], index: 2, kind: input, shape index: {}]
  %s3 = inlined_call_operand.vmem [shape: f32[16,32], index: 3, kind: output, shape index: {}]
  %s4 = sld [smem:[#allocation0]]
  $region22: #{bilstm_crf_forward.2} parent=0
    _
  %s6 = ssub.s32 1, %s4
  %s7 = scalar_select 0, %s6, %s4
  // Predicated region
  $region2: #{bilstm_crf_forward.2} parent=0 // pred_check
    _
  $region3: #{bilstm_crf_forward.2} parent=0 // pred_check_branch
    %9 = sbr.rel (0) target = $region5
  $region4: #{bilstm_crf_forward.2} parent=0 // pred_region
    _
  $region5: #{bilstm_crf_forward.2} parent=0 // pred_fallthru
    _
  // Predicated region
  $region6: #{bilstm_crf_forward.2} parent=0 // pred_check
    _
  $region7: #{bilstm_crf_forward.2} parent=0 // pred_check_branch
    %11 = sbr.rel (0) target = $region9
  $region8: #{bilstm_crf_forward.2} parent=0 // pred_region
    _
  $region9: #{bilstm_crf_forward.2} parent=0 // pred_fallthru
    _
  // Predicated region
  $region10: #{bilstm_crf_forward.2} parent=0 // pred_check
    _
  $region11: #{bilstm_crf_forward.2} parent=0 // pred_check_branch
    %13 = sbr.rel (0) target = $region13
  $region12: #{bilstm_crf_forward.2} parent=0 // pred_region
    _
  $region13: #{bilstm_crf_forward.2} parent=0 // pred_fallthru
    _
  %v15 = vld [vmem:[%s0] sm:$0xf]
  %v16 = vld [vmem:[%s0 + $0x4] sm:$0xf]
  %v17 = vld [vmem:[%s0 + $0x8] sm:$0xf]
  %v18 = vld [vmem:[%s0 + $0xc] sm:$0xf]
  %v19 = vld [vmem:[%s0 + $0x10] sm:$0xf]
  %v20 = vld [vmem:[%s0 + $0x14] sm:$0xf]
  %v21 = vld [vmem:[%s0 + $0x18] sm:$0xf]
  %v22 = vld [vmem:[%s0 + $0x1c] sm:$0xf]
  %v23 = vld [vmem:[%s0 + $0x20] sm:$0xf]
  %v24 = vld [vmem:[%s0 + $0x24] sm:$0xf]
  %v25 = vld [vmem:[%s0 + $0x28] sm:$0xf]
  %v26 = vld [vmem:[%s0 + $0x2c] sm:$0xf]
  %v27 = vld [vmem:[%s0 + $0x30] sm:$0xf]
  %v28 = vld [vmem:[%s0 + $0x34] sm:$0xf]
  %v29 = vld [vmem:[%s0 + $0x38] sm:$0xf]
  %v30 = vld [vmem:[%s0 + $0x3c] sm:$0xf]
  %v31 = vld [vmem:[%s0 + $0x40] sm:$0xf]
  %v32 = vld [vmem:[%s0 + $0x44] sm:$0xf]
  %v33 = vld [vmem:[%s0 + $0x48] sm:$0xf]
  %v34 = vld [vmem:[%s0 + $0x4c] sm:$0xf]
  %v35 = vld [vmem:[%s0 + $0x50] sm:$0xf]
  %v36 = vld [vmem:[%s0 + $0x54] sm:$0xf]
  %v37 = vld [vmem:[%s0 + $0x58] sm:$0xf]
  %v38 = vld [vmem:[%s0 + $0x5c] sm:$0xf]
  %v39 = vld [vmem:[%s0 + $0x60] sm:$0xf]
  %v40 = vld [vmem:[%s0 + $0x64] sm:$0xf]
  %v41 = vld [vmem:[%s0 + $0x68] sm:$0xf]
  %v42 = vld [vmem:[%s0 + $0x6c] sm:$0xf]
  %v43 = vld [vmem:[%s1] sm:$0xf]
  %v44 = vld [vmem:[%s1 + $0x4] sm:$0xf]
  %v45 = vld [vmem:[%s1 + $0x8] sm:$0xf]
  %v46 = vld [vmem:[%s1 + $0xc] sm:$0x1]
  %v47 = vld [vmem:[%s0 + $0x70] sm:$0xf]
  %v48 = vld [vmem:[%s0 + $0x74] sm:$0xf]
  %s49 = scalar_lea.vmem %s1, 16
  %v50 = vld [vmem:[%s49] sm:$0xf]
  %v51 = vld [vmem:[%s49 + $0x4] sm:$0xf]
  %v52 = vld [vmem:[%s49 + $0x8] sm:$0xf]
  %v53 = vld [vmem:[%s49 + $0xc] sm:$0x1]
  %v82 = vunpack.c.l.b16 %v17
  %v83 = vunpack.c.l.b16 %v18
  %v84 = vunpack.c.l.b16 %v19
  %v85 = vunpack.c.l.b16 %v20
  %v86 = vunpack.c.l.b16 %v21
  %v87 = vunpack.c.l.b16 %v22
  %v88 = vunpack.c.l.b16 %v23
  %v89 = vunpack.c.l.b16 %v24
  %v90 = vunpack.c.l.b16 %v25
  %v91 = vunpack.c.l.b16 %v26
  %v92 = vunpack.c.l.b16 %v27
  %v93 = vunpack.c.l.b16 %v28
  %v94 = vunpack.c.l.b16 %v29
  %v95 = vunpack.c.l.b16 %v30
  %v96 = vunpack.c.l.b16 %v31
  %v97 = vunpack.c.l.b16 %v32
  %v98 = vunpack.c.l.b16 %v33
  %v99 = vunpack.c.l.b16 %v34
  %v100 = vunpack.c.l.b16 %v35
  %v101 = vunpack.c.l.b16 %v36
  %v102 = vunpack.c.l.b16 %v37
  %v103 = vunpack.c.l.b16 %v38
  %v104 = vunpack.c.l.b16 %v39
  %v105 = vunpack.c.l.b16 %v40
  %v106 = vunpack.c.l.b16 %v41
  %v107 = vunpack.c.l.b16 %v42
  %v108 = vunpack.c.l.b16 %v47
  %v109 = vunpack.c.l.b16 %v48
  %v110 = vpack.c.b16 %v83, %v82
  %v111 = vpack.c.b16 %v85, %v84
  %v112 = vpack.c.b16 %v87, %v86
  %v113 = vpack.c.b16 %v89, %v88
  %v114 = vpack.c.b16 %v91, %v90
  %v115 = vpack.c.b16 %v93, %v92
  %v116 = vpack.c.b16 %v95, %v94
  %v117 = vpack.c.b16 %v97, %v96
  %v118 = vpack.c.b16 %v99, %v98
  %v119 = vpack.c.b16 %v101, %v100
  %v120 = vpack.c.b16 %v103, %v102
  %v121 = vpack.c.b16 %v105, %v104
  %v122 = vpack.c.b16 %v107, %v106
  %v123 = vpack.c.b16 %v109, %v108
  %v128 = vunpack.c.l.b16 %v50
  %v129 = vunpack.c.l.b16 %v51
  %v130 = vunpack.c.l.b16 %v52
  %v131 = vunpack.c.l.b16 %v53
  %v132 = vpack.c.b16 %v129, %v128
  %v133 = vpack.c.b16 %v131, %v130
  %vm135 = vcmask 203776
  %v137 = vsel %vm135, %v110, 0
  %v140 = vsel %vm135, %v111, 0
  %v143 = vsel %vm135, %v112, 0
  %v146 = vsel %vm135, %v113, 0
  %v149 = vsel %vm135, %v114, 0
  %v152 = vsel %vm135, %v115, 0
  %v155 = vsel %vm135, %v116, 0
  %v158 = vsel %vm135, %v117, 0
  %v161 = vsel %vm135, %v118, 0
  %v164 = vsel %vm135, %v119, 0
  %v167 = vsel %vm135, %v120, 0
  %v170 = vsel %vm135, %v121, 0
  %v173 = vsel %vm135, %v122, 0
  %v176 = vsel %vm135, %v123, 0
  %vm178 = vcmask 1043456
  %vm179 = vcmask 1044480
  %v180 = vsel %vm178, 4294967295, 65535
  %v181 = vsel %vm179, %v180, 0
  %v183 = vand.u32 %v133, %v181
  %185 = vmatprep.subr.bf16.mxu0 0
  %186 = vmatpush1.bf16.msra.mxu0 %v132
  %187 = vmatprep.subr.bf16.mxu0 0
  %188 = vmatpush1.bf16.msra.mxu0 %v183
  %189 = vmatprep.subr.bf16.mxu0 0
  %190 = vmatpush1.bf16.msra.mxu0 0
  %191 = vmatprep.subr.bf16.mxu0 0
  %192 = vmatpush1.bf16.msra.mxu0 0
  %193 = vmatprep.subr.bf16.mxu0 0
  %194 = vmatpush1.bf16.msra.mxu0 0
  %195 = vmatprep.subr.bf16.mxu0 0
  %196 = vmatpush1.bf16.msra.mxu0 0
  %197 = vmatprep.subr.bf16.mxu0 0
  %198 = vmatpush1.bf16.msra.mxu0 0
  %199 = vmatprep.subr.bf16.mxu0 0
  %200 = vmatpush1.bf16.msra.mxu0 0
  %201 = vmatprep.subr.bf16.mxu0 0
  %202 = vmatpush1.bf16.msra.mxu0 0
  %203 = vmatprep.subr.bf16.mxu0 0
  %204 = vmatpush1.bf16.msra.mxu0 0
  %205 = vmatprep.subr.bf16.mxu0 0
  %206 = vmatpush1.bf16.msra.mxu0 0
  %207 = vmatprep.subr.bf16.mxu0 0
  %208 = vmatpush1.bf16.msra.mxu0 0
  %209 = vmatprep.subr.bf16.mxu0 0
  %210 = vmatpush1.bf16.msra.mxu0 0
  %211 = vmatprep.subr.bf16.mxu0 0
  %212 = vmatpush1.bf16.msra.mxu0 0
  %213 = vmatprep.subr.bf16.mxu0 0
  %214 = vmatpush1.bf16.msra.mxu0 0
  %215 = vmatprep.subr.bf16.mxu0 0
  %216 = vmatpush1.bf16.msra.mxu0 0
  %217 = vmatprep.mubr.bf16.mxu0 0
  %218 = vmatmul.mubr.bf16.gmra.mrb[0].mxu0 %v137
  %v219 = vpop.f32.mrb[0].mxu0
  %v220 = vadd.f32 0.0, %v219
  %v221 = vpop.f32.mrb[0].mxu0
  %v222 = vpop.f32.mrb[0].mxu0
  %v223 = vadd.f32 0.0, %v222
  %v224 = vpop.f32.mrb[0].mxu0
  %225 = vmatprep.mubr.bf16.mxu0 0
  %226 = vmatmul.mubr.bf16.gmra.mrb[0].mxu0 %v140
  %v227 = vpop.f32.mrb[0].mxu0
  %v228 = vadd.f32 0.0, %v227
  %v229 = vpop.f32.mrb[0].mxu0
  %v230 = vpop.f32.mrb[0].mxu0
  %v231 = vadd.f32 0.0, %v230
  %v232 = vpop.f32.mrb[0].mxu0
  %233 = vmatprep.mubr.bf16.mxu0 0
  %234 = vmatmul.mubr.bf16.gmra.mrb[0].mxu0 %v143
  %v235 = vpop.f32.mrb[0].mxu0
  %v236 = vadd.f32 0.0, %v235
  %v237 = vpop.f32.mrb[0].mxu0
  %v238 = vpop.f32.mrb[0].mxu0
  %v239 = vadd.f32 0.0, %v238
  %v240 = vpop.f32.mrb[0].mxu0
  %241 = vmatprep.mubr.bf16.mxu0 0
  %242 = vmatmul.mubr.bf16.gmra.mrb[0].mxu0 %v146
  %v243 = vpop.f32.mrb[0].mxu0
  %v244 = vadd.f32 0.0, %v243
  %v245 = vpop.f32.mrb[0].mxu0
  %v246 = vpop.f32.mrb[0].mxu0
  %v247 = vadd.f32 0.0, %v246
  %v248 = vpop.f32.mrb[0].mxu0
  %249 = vmatprep.mubr.bf16.mxu0 0
  %250 = vmatmul.mubr.bf16.gmra.mrb[0].mxu0 %v149
  %v251 = vpop.f32.mrb[0].mxu0
  %v252 = vadd.f32 0.0, %v251
  %v253 = vpop.f32.mrb[0].mxu0
  %v254 = vpop.f32.mrb[0].mxu0
  %v255 = vadd.f32 0.0, %v254
  %v256 = vpop.f32.mrb[0].mxu0
  %257 = vmatprep.mubr.bf16.mxu0 0
  %258 = vmatmul.mubr.bf16.gmra.mrb[0].mxu0 %v152
  %v259 = vpop.f32.mrb[0].mxu0
  %v260 = vadd.f32 0.0, %v259
  %v261 = vpop.f32.mrb[0].mxu0
  %v262 = vpop.f32.mrb[0].mxu0
  %v263 = vadd.f32 0.0, %v262
  %v264 = vpop.f32.mrb[0].mxu0
  %265 = vmatprep.mubr.bf16.mxu0 0
  %266 = vmatmul.mubr.bf16.gmra.mrb[0].mxu0 %v155
  %v267 = vpop.f32.mrb[0].mxu0
  %v268 = vadd.f32 0.0, %v267
  %v269 = vpop.f32.mrb[0].mxu0
  %v270 = vpop.f32.mrb[0].mxu0
  %v271 = vadd.f32 0.0, %v270
  %v272 = vpop.f32.mrb[0].mxu0
  %273 = vmatprep.mubr.bf16.mxu0 0
  %274 = vmatmul.mubr.bf16.gmra.mrb[0].mxu0 %v158
  %v275 = vpop.f32.mrb[0].mxu0
  %v276 = vadd.f32 0.0, %v275
  %v277 = vpop.f32.mrb[0].mxu0
  %v278 = vpop.f32.mrb[0].mxu0
  %v279 = vadd.f32 0.0, %v278
  %v280 = vpop.f32.mrb[0].mxu0
  %281 = vmatprep.mubr.bf16.mxu0 0
  %282 = vmatmul.mubr.bf16.gmra.mrb[0].mxu0 %v161
  %v283 = vpop.f32.mrb[0].mxu0
  %v284 = vadd.f32 0.0, %v283
  %v285 = vpop.f32.mrb[0].mxu0
  %v286 = vpop.f32.mrb[0].mxu0
  %v287 = vadd.f32 0.0, %v286
  %v288 = vpop.f32.mrb[0].mxu0
  %289 = vmatprep.mubr.bf16.mxu0 0
  %290 = vmatmul.mubr.bf16.gmra.mrb[0].mxu0 %v164
  %v291 = vpop.f32.mrb[0].mxu0
  %v292 = vadd.f32 0.0, %v291
  %v293 = vpop.f32.mrb[0].mxu0
  %v294 = vpop.f32.mrb[0].mxu0
  %v295 = vadd.f32 0.0, %v294
  %v296 = vpop.f32.mrb[0].mxu0
  %297 = vmatprep.mubr.bf16.mxu0 0
  %298 = vmatmul.mubr.bf16.gmra.mrb[0].mxu0 %v167
  %v299 = vpop.f32.mrb[0].mxu0
  %v300 = vadd.f32 0.0, %v299
  %v301 = vpop.f32.mrb[0].mxu0
  %v302 = vpop.f32.mrb[0].mxu0
  %v303 = vadd.f32 0.0, %v302
  %v304 = vpop.f32.mrb[0].mxu0
  %305 = vmatprep.mubr.bf16.mxu0 0
  %306 = vmatmul.mubr.bf16.gmra.mrb[0].mxu0 %v170
  %v307 = vpop.f32.mrb[0].mxu0
  %v308 = vadd.f32 0.0, %v307
  %v309 = vpop.f32.mrb[0].mxu0
  %v310 = vpop.f32.mrb[0].mxu0
  %v311 = vadd.f32 0.0, %v310
  %v312 = vpop.f32.mrb[0].mxu0
  %313 = vmatprep.mubr.bf16.mxu0 0
  %314 = vmatmul.mubr.bf16.gmra.mrb[0].mxu0 %v173
  %v315 = vpop.f32.mrb[0].mxu0
  %v316 = vadd.f32 0.0, %v315
  %v317 = vpop.f32.mrb[0].mxu0
  %v318 = vpop.f32.mrb[0].mxu0
  %v319 = vadd.f32 0.0, %v318
  %v320 = vpop.f32.mrb[0].mxu0
  %321 = vmatprep.mubr.bf16.mxu0 0
  %322 = vmatmul.mubr.bf16.gmra.mrb[0].mxu0 %v176
  %v323 = vpop.f32.mrb[0].mxu0
  %v324 = vadd.f32 0.0, %v323
  %v325 = vpop.f32.mrb[0].mxu0
  %v326 = vpop.f32.mrb[0].mxu0
  %v327 = vadd.f32 0.0, %v326
  %v328 = vpop.f32.mrb[0].mxu0
  %329 = vdwg.mxu0
  %v332 = vunpack.c.l.b16 %v15
  %v333 = vunpack.c.l.b16 %v16
  %v334 = vpack.c.b16 %v333, %v332
  %v339 = vunpack.c.l.b16 %v43
  %v340 = vunpack.c.l.b16 %v44
  %v341 = vunpack.c.l.b16 %v45
  %v342 = vunpack.c.l.b16 %v46
  %v343 = vpack.c.b16 %v340, %v339
  %v344 = vpack.c.b16 %v342, %v341
  %v347 = vsel %vm135, %v334, 0
  %v350 = vand.u32 %v344, %v181
  %352 = vmatprep.subr.bf16.mxu0 0
  %353 = vmatpush1.bf16.msra.mxu0 %v343
  %354 = vmatprep.subr.bf16.mxu0 0
  %355 = vmatpush1.bf16.msra.mxu0 %v350
  %356 = vmatprep.subr.bf16.mxu0 0
  %357 = vmatpush1.bf16.msra.mxu0 0
  %358 = vmatprep.subr.bf16.mxu0 0
  %359 = vmatpush1.bf16.msra.mxu0 0
  %360 = vmatprep.subr.bf16.mxu0 0
  %361 = vmatpush1.bf16.msra.mxu0 0
  %362 = vmatprep.subr.bf16.mxu0 0
  %363 = vmatpush1.bf16.msra.mxu0 0
  %364 = vmatprep.subr.bf16.mxu0 0
  %365 = vmatpush1.bf16.msra.mxu0 0
  %366 = vmatprep.subr.bf16.mxu0 0
  %367 = vmatpush1.bf16.msra.mxu0 0
  %368 = vmatprep.subr.bf16.mxu0 0
  %369 = vmatpush1.bf16.msra.mxu0 0
  %370 = vmatprep.subr.bf16.mxu0 0
  %371 = vmatpush1.bf16.msra.mxu0 0
  %372 = vmatprep.subr.bf16.mxu0 0
  %373 = vmatpush1.bf16.msra.mxu0 0
  %374 = vmatprep.subr.bf16.mxu0 0
  %375 = vmatpush1.bf16.msra.mxu0 0
  %376 = vmatprep.subr.bf16.mxu0 0
  %377 = vmatpush1.bf16.msra.mxu0 0
  %378 = vmatprep.subr.bf16.mxu0 0
  %379 = vmatpush1.bf16.msra.mxu0 0
  %380 = vmatprep.subr.bf16.mxu0 0
  %381 = vmatpush1.bf16.msra.mxu0 0
  %382 = vmatprep.subr.bf16.mxu0 0
  %383 = vmatpush1.bf16.msra.mxu0 0
  %384 = vmatprep.mubr.bf16.mxu0 0
  %385 = vmatmul.mubr.bf16.gmra.mrb[0].mxu0 %v347
  %v386 = vpop.f32.mrb[0].mxu0
  %v387 = vadd.f32 %v220, %v386
  %v388 = vpop.f32.mrb[0].mxu0
  %v389 = vpop.f32.mrb[0].mxu0
  %v390 = vadd.f32 %v223, %v389
  %v391 = vpop.f32.mrb[0].mxu0
  %392 = vmatprep.mubr.bf16.mxu0 0
  %393 = vmatmul.mubr.bf16.gmra.mrb[0].mxu0 %v137
  %v394 = vpop.f32.mrb[0].mxu0
  %v395 = vadd.f32 %v228, %v394
  %v396 = vpop.f32.mrb[0].mxu0
  %v397 = vpop.f32.mrb[0].mxu0
  %v398 = vadd.f32 %v231, %v397
  %v399 = vpop.f32.mrb[0].mxu0
  %400 = vmatprep.mubr.bf16.mxu0 0
  %401 = vmatmul.mubr.bf16.gmra.mrb[0].mxu0 %v140
  %v402 = vpop.f32.mrb[0].mxu0
  %v403 = vadd.f32 %v236, %v402
  %v404 = vpop.f32.mrb[0].mxu0
  %v405 = vpop.f32.mrb[0].mxu0
  %v406 = vadd.f32 %v239, %v405
  %v407 = vpop.f32.mrb[0].mxu0
  %408 = vmatprep.mubr.bf16.mxu0 0
  %409 = vmatmul.mubr.bf16.gmra.mrb[0].mxu0 %v143
  %v410 = vpop.f32.mrb[0].mxu0
  %v411 = vadd.f32 %v244, %v410
  %v412 = vpop.f32.mrb[0].mxu0
  %v413 = vpop.f32.mrb[0].mxu0
  %v414 = vadd.f32 %v247, %v413
  %v415 = vpop.f32.mrb[0].mxu0
  %416 = vmatprep.mubr.bf16.mxu0 0
  %417 = vmatmul.mubr.bf16.gmra.mrb[0].mxu0 %v146
  %v418 = vpop.f32.mrb[0].mxu0
  %v419 = vadd.f32 %v252, %v418
  %v420 = vpop.f32.mrb[0].mxu0
  %v421 = vpop.f32.mrb[0].mxu0
  %v422 = vadd.f32 %v255, %v421
  %v423 = vpop.f32.mrb[0].mxu0
  %424 = vmatprep.mubr.bf16.mxu0 0
  %425 = vmatmul.mubr.bf16.gmra.mrb[0].mxu0 %v149
  %v426 = vpop.f32.mrb[0].mxu0
  %v427 = vadd.f32 %v260, %v426
  %v428 = vpop.f32.mrb[0].mxu0
  %v429 = vpop.f32.mrb[0].mxu0
  %v430 = vadd.f32 %v263, %v429
  %v431 = vpop.f32.mrb[0].mxu0
  %432 = vmatprep.mubr.bf16.mxu0 0
  %433 = vmatmul.mubr.bf16.gmra.mrb[0].mxu0 %v152
  %v434 = vpop.f32.mrb[0].mxu0
  %v435 = vadd.f32 %v268, %v434
  %v436 = vpop.f32.mrb[0].mxu0
  %v437 = vpop.f32.mrb[0].mxu0
  %v438 = vadd.f32 %v271, %v437
  %v439 = vpop.f32.mrb[0].mxu0
  %440 = vmatprep.mubr.bf16.mxu0 0
  %441 = vmatmul.mubr.bf16.gmra.mrb[0].mxu0 %v155
  %v442 = vpop.f32.mrb[0].mxu0
  %v443 = vadd.f32 %v276, %v442
  %v444 = vpop.f32.mrb[0].mxu0
  %v445 = vpop.f32.mrb[0].mxu0
  %v446 = vadd.f32 %v279, %v445
  %v447 = vpop.f32.mrb[0].mxu0
  %448 = vmatprep.mubr.bf16.mxu0 0
  %449 = vmatmul.mubr.bf16.gmra.mrb[0].mxu0 %v158
  %v450 = vpop.f32.mrb[0].mxu0
  %v451 = vadd.f32 %v284, %v450
  %v452 = vpop.f32.mrb[0].mxu0
  %v453 = vpop.f32.mrb[0].mxu0
  %v454 = vadd.f32 %v287, %v453
  %v455 = vpop.f32.mrb[0].mxu0
  %456 = vmatprep.mubr.bf16.mxu0 0
  %457 = vmatmul.mubr.bf16.gmra.mrb[0].mxu0 %v161
  %v458 = vpop.f32.mrb[0].mxu0
  %v459 = vadd.f32 %v292, %v458
  %v460 = vpop.f32.mrb[0].mxu0
  %v461 = vpop.f32.mrb[0].mxu0
  %v462 = vadd.f32 %v295, %v461
  %v463 = vpop.f32.mrb[0].mxu0
  %464 = vmatprep.mubr.bf16.mxu0 0
  %465 = vmatmul.mubr.bf16.gmra.mrb[0].mxu0 %v164
  %v466 = vpop.f32.mrb[0].mxu0
  %v467 = vadd.f32 %v300, %v466
  %v468 = vpop.f32.mrb[0].mxu0
  %v469 = vpop.f32.mrb[0].mxu0
  %v470 = vadd.f32 %v303, %v469
  %v471 = vpop.f32.mrb[0].mxu0
  %472 = vmatprep.mubr.bf16.mxu0 0
  %473 = vmatmul.mubr.bf16.gmra.mrb[0].mxu0 %v167
  %v474 = vpop.f32.mrb[0].mxu0
  %v475 = vadd.f32 %v308, %v474
  %v476 = vpop.f32.mrb[0].mxu0
  %v477 = vpop.f32.mrb[0].mxu0
  %v478 = vadd.f32 %v311, %v477
  %v479 = vpop.f32.mrb[0].mxu0
  %480 = vmatprep.mubr.bf16.mxu0 0
  %481 = vmatmul.mubr.bf16.gmra.mrb[0].mxu0 %v170
  %v482 = vpop.f32.mrb[0].mxu0
  %v483 = vadd.f32 %v316, %v482
  %v484 = vpop.f32.mrb[0].mxu0
  %v485 = vpop.f32.mrb[0].mxu0
  %v486 = vadd.f32 %v319, %v485
  %v487 = vpop.f32.mrb[0].mxu0
  %488 = vmatprep.mubr.bf16.mxu0 0
  %489 = vmatmul.mubr.bf16.gmra.mrb[0].mxu0 %v173
  %v490 = vpop.f32.mrb[0].mxu0
  %v491 = vadd.f32 %v324, %v490
  %v492 = vpop.f32.mrb[0].mxu0
  %v493 = vpop.f32.mrb[0].mxu0
  %v494 = vadd.f32 %v327, %v493
  %v495 = vpop.f32.mrb[0].mxu0
  %496 = vdwg.mxu0
  %v497 = vld [vmem:[%s0 + $0x10] sm:$0xf]
  %v498 = vld [vmem:[%s0 + $0x14] sm:$0xf]
  %v499 = vld [vmem:[%s0 + $0x18] sm:$0xf]
  %v500 = vld [vmem:[%s0 + $0x1c] sm:$0xf]
  %v501 = vld [vmem:[%s0 + $0x20] sm:$0xf]
  %v502 = vld [vmem:[%s0 + $0x24] sm:$0xf]
  %v503 = vld [vmem:[%s0 + $0x28] sm:$0xf]
  %v504 = vld [vmem:[%s0 + $0x2c] sm:$0xf]
  %v505 = vld [vmem:[%s0 + $0x30] sm:$0xf]
  %v506 = vld [vmem:[%s0 + $0x34] sm:$0xf]
  %v507 = vld [vmem:[%s0 + $0x38] sm:$0xf]
  %v508 = vld [vmem:[%s0 + $0x3c] sm:$0xf]
  %v509 = vld [vmem:[%s0 + $0x40] sm:$0xf]
  %v510 = vld [vmem:[%s0 + $0x44] sm:$0xf]
  %v511 = vld [vmem:[%s0 + $0x48] sm:$0xf]
  %v512 = vld [vmem:[%s0 + $0x4c] sm:$0xf]
  %v513 = vld [vmem:[%s0 + $0x50] sm:$0xf]
  %v514 = vld [vmem:[%s0 + $0x54] sm:$0xf]
  %v515 = vld [vmem:[%s0 + $0x58] sm:$0xf]
  %v516 = vld [vmem:[%s0 + $0x5c] sm:$0xf]
  %v517 = vld [vmem:[%s0 + $0x60] sm:$0xf]
  %v518 = vld [vmem:[%s0 + $0x64] sm:$0xf]
  %v519 = vld [vmem:[%s0 + $0x68] sm:$0xf]
  %v520 = vld [vmem:[%s0 + $0x6c] sm:$0xf]
  %v521 = vld [vmem:[%s0 + $0x70] sm:$0xf]
  %v522 = vld [vmem:[%s0 + $0x74] sm:$0xf]
  %v523 = vld [vmem:[%s0 + $0x78] sm:$0xf]
  %v524 = vld [vmem:[%s0 + $0x7c] sm:$0xf]
  %s525 = scalar_lea.vmem %s1, 32
  %v526 = vld [vmem:[%s525] sm:$0xf]
  %v527 = vld [vmem:[%s525 + $0x4] sm:$0xf]
  %v528 = vld [vmem:[%s525 + $0x8] sm:$0xf]
  %v529 = vld [vmem:[%s525 + $0xc] sm:$0x1]
  %v558 = vunpack.c.l.b16 %v497
  %v559 = vunpack.c.l.b16 %v498
  %v560 = vunpack.c.l.b16 %v499
  %v561 = vunpack.c.l.b16 %v500
  %v562 = vunpack.c.l.b16 %v501
  %v563 = vunpack.c.l.b16 %v502
  %v564 = vunpack.c.l.b16 %v503
  %v565 = vunpack.c.l.b16 %v504
  %v566 = vunpack.c.l.b16 %v505
  %v567 = vunpack.c.l.b16 %v506
  %v568 = vunpack.c.l.b16 %v507
  %v569 = vunpack.c.l.b16 %v508
  %v570 = vunpack.c.l.b16 %v509
  %v571 = vunpack.c.l.b16 %v510
  %v572 = vunpack.c.l.b16 %v511
  %v573 = vunpack.c.l.b16 %v512
  %v574 = vunpack.c.l.b16 %v513
  %v575 = vunpack.c.l.b16 %v514
  %v576 = vunpack.c.l.b16 %v515
  %v577 = vunpack.c.l.b16 %v516
  %v578 = vunpack.c.l.b16 %v517
  %v579 = vunpack.c.l.b16 %v518
  %v580 = vunpack.c.l.b16 %v519
  %v581 = vunpack.c.l.b16 %v520
  %v582 = vunpack.c.l.b16 %v521
  %v583 = vunpack.c.l.b16 %v522
  %v584 = vunpack.c.l.b16 %v523
  %v585 = vunpack.c.l.b16 %v524
  %v586 = vpack.c.b16 %v559, %v558
  %v587 = vpack.c.b16 %v561, %v560
  %v588 = vpack.c.b16 %v563, %v562
  %v589 = vpack.c.b16 %v565, %v564
  %v590 = vpack.c.b16 %v567, %v566
  %v591 = vpack.c.b16 %v569, %v568
  %v592 = vpack.c.b16 %v571, %v570
  %v593 = vpack.c.b16 %v573, %v572
  %v594 = vpack.c.b16 %v575, %v574
  %v595 = vpack.c.b16 %v577, %v576
  %v596 = vpack.c.b16 %v579, %v578
  %v597 = vpack.c.b16 %v581, %v580
  %v598 = vpack.c.b16 %v583, %v582
  %v599 = vpack.c.b16 %v585, %v584
  %v604 = vunpack.c.l.b16 %v526
  %v605 = vunpack.c.l.b16 %v527
  %v606 = vunpack.c.l.b16 %v528
  %v607 = vunpack.c.l.b16 %v529
  %v608 = vpack.c.b16 %v605, %v604
  %v609 = vpack.c.b16 %v607, %v606
  %v612 = vsel %vm135, %v586, 0
  %v615 = vsel %vm135, %v587, 0
  %v618 = vsel %vm135, %v588, 0
  %v621 = vsel %vm135, %v589, 0
  %v624 = vsel %vm135, %v590, 0
  %v627 = vsel %vm135, %v591, 0
  %v630 = vsel %vm135, %v592, 0
  %v633 = vsel %vm135, %v593, 0
  %v636 = vsel %vm135, %v594, 0
  %v639 = vsel %vm135, %v595, 0
  %v642 = vsel %vm135, %v596, 0
  %v645 = vsel %vm135, %v597, 0
  %v648 = vsel %vm135, %v598, 0
  %v651 = vsel %vm135, %v599, 0
  %v654 = vand.u32 %v609, %v181
  %656 = vmatprep.subr.bf16.mxu0 0
  %657 = vmatpush1.bf16.msra.mxu0 %v608
  %658 = vmatprep.subr.bf16.mxu0 0
  %659 = vmatpush1.bf16.msra.mxu0 %v654
  %660 = vmatprep.subr.bf16.mxu0 0
  %661 = vmatpush1.bf16.msra.mxu0 0
  %662 = vmatprep.subr.bf16.mxu0 0
  %663 = vmatpush1.bf16.msra.mxu0 0
  %664 = vmatprep.subr.bf16.mxu0 0
  %665 = vmatpush1.bf16.msra.mxu0 0
  %666 = vmatprep.subr.bf16.mxu0 0
  %667 = vmatpush1.bf16.msra.mxu0 0
  %668 = vmatprep.subr.bf16.mxu0 0
  %669 = vmatpush1.bf16.msra.mxu0 0
  %670 = vmatprep.subr.bf16.mxu0 0
  %671 = vmatpush1.bf16.msra.mxu0 0
  %672 = vmatprep.subr.bf16.mxu0 0
  %673 = vmatpush1.bf16.msra.mxu0 0
  %674 = vmatprep.subr.bf16.mxu0 0
  %675 = vmatpush1.bf16.msra.mxu0 0
  %676 = vmatprep.subr.bf16.mxu0 0
  %677 = vmatpush1.bf16.msra.mxu0 0
  %678 = vmatprep.subr.bf16.mxu0 0
  %679 = vmatpush1.bf16.msra.mxu0 0
  %680 = vmatprep.subr.bf16.mxu0 0
  %681 = vmatpush1.bf16.msra.mxu0 0
  %682 = vmatprep.subr.bf16.mxu0 0
  %683 = vmatpush1.bf16.msra.mxu0 0
  %684 = vmatprep.subr.bf16.mxu0 0
  %685 = vmatpush1.bf16.msra.mxu0 0
  %686 = vmatprep.subr.bf16.mxu0 0
  %687 = vmatpush1.bf16.msra.mxu0 0
  %688 = vmatprep.mubr.bf16.mxu0 0
  %689 = vmatmul.mubr.bf16.gmra.mrb[0].mxu0 %v612
  %v690 = vpop.f32.mrb[0].mxu0
  %v691 = vadd.f32 0.0, %v690
  %v692 = vpop.f32.mrb[0].mxu0
  %v693 = vpop.f32.mrb[0].mxu0
  %v694 = vadd.f32 0.0, %v693
  %v695 = vpop.f32.mrb[0].mxu0
  %696 = vmatprep.mubr.bf16.mxu0 0
  %697 = vmatmul.mubr.bf16.gmra.mrb[0].mxu0 %v615
  %v698 = vpop.f32.mrb[0].mxu0
  %v699 = vadd.f32 0.0, %v698
  %v700 = vpop.f32.mrb[0].mxu0
  %v701 = vpop.f32.mrb[0].mxu0
  %v702 = vadd.f32 0.0, %v701
  %v703 = vpop.f32.mrb[0].mxu0
  %704 = vmatprep.mubr.bf16.mxu0 0
  %705 = vmatmul.mubr.bf16.gmra.mrb[0].mxu0 %v618
  %v706 = vpop.f32.mrb[0].mxu0
  %v707 = vadd.f32 0.0, %v706
  %v708 = vpop.f32.mrb[0].mxu0
  %v709 = vpop.f32.mrb[0].mxu0
  %v710 = vadd.f32 0.0, %v709
  %v711 = vpop.f32.mrb[0].mxu0
  %712 = vmatprep.mubr.bf16.mxu0 0
  %713 = vmatmul.mubr.bf16.gmra.mrb[0].mxu0 %v621
  %v714 = vpop.f32.mrb[0].mxu0
  %v715 = vadd.f32 0.0, %v714
  %v716 = vpop.f32.mrb[0].mxu0
  %v717 = vpop.f32.mrb[0].mxu0
  %v718 = vadd.f32 0.0, %v717
  %v719 = vpop.f32.mrb[0].mxu0
  %720 = vmatprep.mubr.bf16.mxu0 0
  %721 = vmatmul.mubr.bf16.gmra.mrb[0].mxu0 %v624
  %v722 = vpop.f32.mrb[0].mxu0
  %v723 = vadd.f32 0.0, %v722
  %v724 = vpop.f32.mrb[0].mxu0
  %v725 = vpop.f32.mrb[0].mxu0
  %v726 = vadd.f32 0.0, %v725
  %v727 = vpop.f32.mrb[0].mxu0
  %728 = vmatprep.mubr.bf16.mxu0 0
  %729 = vmatmul.mubr.bf16.gmra.mrb[0].mxu0 %v627
  %v730 = vpop.f32.mrb[0].mxu0
  %v731 = vadd.f32 0.0, %v730
  %v732 = vpop.f32.mrb[0].mxu0
  %v733 = vpop.f32.mrb[0].mxu0
  %v734 = vadd.f32 0.0, %v733
  %v735 = vpop.f32.mrb[0].mxu0
  %736 = vmatprep.mubr.bf16.mxu0 0
  %737 = vmatmul.mubr.bf16.gmra.mrb[0].mxu0 %v630
  %v738 = vpop.f32.mrb[0].mxu0
  %v739 = vadd.f32 0.0, %v738
  %v740 = vpop.f32.mrb[0].mxu0
  %v741 = vpop.f32.mrb[0].mxu0
  %v742 = vadd.f32 0.0, %v741
  %v743 = vpop.f32.mrb[0].mxu0
  %744 = vmatprep.mubr.bf16.mxu0 0
  %745 = vmatmul.mubr.bf16.gmra.mrb[0].mxu0 %v633
  %v746 = vpop.f32.mrb[0].mxu0
  %v747 = vadd.f32 0.0, %v746
  %v748 = vpop.f32.mrb[0].mxu0
  %v749 = vpop.f32.mrb[0].mxu0
  %v750 = vadd.f32 0.0, %v749
  %v751 = vpop.f32.mrb[0].mxu0
  %752 = vmatprep.mubr.bf16.mxu0 0
  %753 = vmatmul.mubr.bf16.gmra.mrb[0].mxu0 %v636
  %v754 = vpop.f32.mrb[0].mxu0
  %v755 = vadd.f32 0.0, %v754
  %v756 = vpop.f32.mrb[0].mxu0
  %v757 = vpop.f32.mrb[0].mxu0
  %v758 = vadd.f32 0.0, %v757
  %v759 = vpop.f32.mrb[0].mxu0
  %760 = vmatprep.mubr.bf16.mxu0 0
  %761 = vmatmul.mubr.bf16.gmra.mrb[0].mxu0 %v639
  %v762 = vpop.f32.mrb[0].mxu0
  %v763 = vadd.f32 0.0, %v762
  %v764 = vpop.f32.mrb[0].mxu0
  %v765 = vpop.f32.mrb[0].mxu0
  %v766 = vadd.f32 0.0, %v765
  %v767 = vpop.f32.mrb[0].mxu0
  %768 = vmatprep.mubr.bf16.mxu0 0
  %769 = vmatmul.mubr.bf16.gmra.mrb[0].mxu0 %v642
  %v770 = vpop.f32.mrb[0].mxu0
  %v771 = vadd.f32 0.0, %v770
  %v772 = vpop.f32.mrb[0].mxu0
  %v773 = vpop.f32.mrb[0].mxu0
  %v774 = vadd.f32 0.0, %v773
  %v775 = vpop.f32.mrb[0].mxu0
  %776 = vmatprep.mubr.bf16.mxu0 0
  %777 = vmatmul.mubr.bf16.gmra.mrb[0].mxu0 %v645
  %v778 = vpop.f32.mrb[0].mxu0
  %v779 = vadd.f32 0.0, %v778
  %v780 = vpop.f32.mrb[0].mxu0
  %v781 = vpop.f32.mrb[0].mxu0
  %v782 = vadd.f32 0.0, %v781
  %v783 = vpop.f32.mrb[0].mxu0
  %784 = vmatprep.mubr.bf16.mxu0 0
  %785 = vmatmul.mubr.bf16.gmra.mrb[0].mxu0 %v648
  %v786 = vpop.f32.mrb[0].mxu0
  %v787 = vadd.f32 0.0, %v786
  %v788 = vpop.f32.mrb[0].mxu0
  %v789 = vpop.f32.mrb[0].mxu0
  %v790 = vadd.f32 0.0, %v789
  %v791 = vpop.f32.mrb[0].mxu0
  %792 = vmatprep.mubr.bf16.mxu0 0
  %793 = vmatmul.mubr.bf16.gmra.mrb[0].mxu0 %v651
  %v794 = vpop.f32.mrb[0].mxu0
  %v795 = vadd.f32 0.0, %v794
  %v796 = vpop.f32.mrb[0].mxu0
  %v797 = vpop.f32.mrb[0].mxu0
  %v798 = vadd.f32 0.0, %v797
  %v799 = vpop.f32.mrb[0].mxu0
  %800 = vdwg.mxu0
  %v801 = vadd.f32 %v387, %v691
  %v802 = vadd.f32 %v390, %v694
  %v803 = vadd.f32 %v395, %v699
  %v804 = vadd.f32 %v398, %v702
  %v805 = vadd.f32 %v403, %v707
  %v806 = vadd.f32 %v406, %v710
  %v807 = vadd.f32 %v411, %v715
  %v808 = vadd.f32 %v414, %v718
  %v809 = vadd.f32 %v419, %v723
  %v810 = vadd.f32 %v422, %v726
  %v811 = vadd.f32 %v427, %v731
  %v812 = vadd.f32 %v430, %v734
  %v813 = vadd.f32 %v435, %v739
  %v814 = vadd.f32 %v438, %v742
  %v815 = vadd.f32 %v443, %v747
  %v816 = vadd.f32 %v446, %v750
  %v817 = vadd.f32 %v451, %v755
  %v818 = vadd.f32 %v454, %v758
  %v819 = vadd.f32 %v459, %v763
  %v820 = vadd.f32 %v462, %v766
  %v821 = vadd.f32 %v467, %v771
  %v822 = vadd.f32 %v470, %v774
  %v823 = vadd.f32 %v475, %v779
  %v824 = vadd.f32 %v478, %v782
  %v825 = vadd.f32 %v483, %v787
  %v826 = vadd.f32 %v486, %v790
  %v827 = vadd.f32 %v491, %v795
  %v828 = vadd.f32 %v494, %v798
  %v829 = vmax.f32 %v801, %v803
  %v830 = vmax.f32 %v802, %v804
  %v831 = vmax.f32 %v829, %v805
  %v832 = vmax.f32 %v830, %v806
  %v833 = vmax.f32 %v831, %v807
  %v834 = vmax.f32 %v832, %v808
  %v835 = vmax.f32 %v833, %v809
  %v836 = vmax.f32 %v834, %v810
  %v837 = vmax.f32 %v835, %v811
  %v838 = vmax.f32 %v836, %v812
  %v839 = vmax.f32 %v837, %v813
  %v840 = vmax.f32 %v838, %v814
  %v841 = vmax.f32 %v839, %v815
  %v842 = vmax.f32 %v840, %v816
  %v843 = vmax.f32 %v841, %v817
  %v844 = vmax.f32 %v842, %v818
  %v845 = vmax.f32 %v843, %v819
  %v846 = vmax.f32 %v844, %v820
  %v847 = vmax.f32 %v845, %v821
  %v848 = vmax.f32 %v846, %v822
  %v849 = vmax.f32 %v847, %v823
  %v850 = vmax.f32 %v848, %v824
  %v851 = vmax.f32 %v849, %v825
  %v852 = vmax.f32 %v850, %v826
  %v853 = vmax.f32 %v851, %v827
  %v854 = vmax.f32 %v852, %v828
  %v855 = vld [vmem:[%s2] sm:$0x1]
  %v857 = vlaneseq
  %v858 = vshrl.u32 %v857, 7
  %v859 = vsub.s32 0, %v858
  %v860 = vrot.slane %v855, %v859
  %v862 = vadd.f32 %v853, %v860
  %v863 = vadd.f32 %v854, %v860
  %vm864 = vcmask 261120
  %865 = vst.msk [vmem:[%s3] sm:$0xff] %vm864, %v862
  %866 = vst.msk [vmem:[%s3 + $0x8] sm:$0xff] %vm864, %v863
  // Predicated region
  $region14: #{bilstm_crf_forward.2} parent=0 // pred_check
    _
  $region15: #{bilstm_crf_forward.2} parent=0 // pred_check_branch
    %868 = sbr.rel (0) target = $region17
  $region16: #{bilstm_crf_forward.2} parent=0 // pred_region
    _
  $region17: #{bilstm_crf_forward.2} parent=0 // pred_fallthru
    _
  // Predicated region
  $region18: #{bilstm_crf_forward.2} parent=0 // pred_check
    _
  $region19: #{bilstm_crf_forward.2} parent=0 // pred_check_branch
    %870 = sbr.rel (0) target = $region21
  $region20: #{bilstm_crf_forward.2} parent=0 // pred_region
    _
  $region21: #{bilstm_crf_forward.2} parent=0 // pred_fallthru
    _

// kernel: bilstm_crf_forward.3
$region0: #{bilstm_crf_forward.3}
  #allocation0 [shape = 'u32[]', space=smem, size = 0x4, offset = 0x4, fixed_abs, tag = 'smem constant byte address 0x4 - core index']
  #allocation1 [shape = 'u32[144,128]{1,0:T(1,128)}', space=vmem, size = 0x12000, scoped, tag = 'internal scratch']
  %s0 = inlined_call_operand.vmem [shape: bf16[16,64], index: 0, kind: input, shape index: {}]
  %s1 = inlined_call_operand.vmem [shape: bf16[64,256], index: 1, kind: input, shape index: {}]
  %s2 = inlined_call_operand.vmem [shape: bf16[64,256], index: 2, kind: input, shape index: {}]
  %s3 = inlined_call_operand.vmem [shape: f32[1,256], index: 3, kind: input, shape index: {}]
  %s4 = inlined_call_operand.vmem [shape: f32[2,512], index: 4, kind: output, shape index: {0}]
  %s5 = inlined_call_operand.hbm [shape: f32[2,64], index: 5, kind: output, shape index: {1}]
  %s6 = inlined_call_operand.hbm [shape: s32[2,64], index: 6, kind: output, shape index: {2}]
  %7 = xla_tuple %s4, %s5, %s6
  %s8 = sld [smem:[#allocation0]]
  $region42: #{bilstm_crf_forward.3} parent=0
    _
  %s10 = ssub.s32 1, %s8
  %s11 = scalar_select 0, %s10, %s8
  $region1: #{bilstm_crf_forward.3} parent=0
    #allocation2 [shape = 'u8[1024]{0}', space=vmem, size = 0x400, scoped, tag = 'output window, operand 1, single buffered']
    #allocation3 [shape = 's32[1]{0}', space=sflag, size = 0x4, scoped, tag = 'scoped memory for bilstm_crf_forward.3']
    #allocation4 [shape = 'u8[1024]{0}', space=vmem, size = 0x400, scoped, tag = 'output window, operand 2, single buffered']
    #allocation5 [shape = 's32[1]{0}', space=sflag, size = 0x4, scoped, tag = 'scoped memory for bilstm_crf_forward.3']
    %12 = vsyncpa [#allocation3], 0
    %13 = vsyncpa [#allocation5], 0
    // Predicated region
    $region2: #{bilstm_crf_forward.3} parent=1 // pred_check
      _
    $region3: #{bilstm_crf_forward.3} parent=1 // pred_check_branch
      %15 = sbr.rel (0) target = $region5
    $region4: #{bilstm_crf_forward.3} parent=1 // pred_region
      _
    $region5: #{bilstm_crf_forward.3} parent=1 // pred_fallthru
      _
    // Predicated region
    $region6: #{bilstm_crf_forward.3} parent=1 // pred_check
      _
    $region7: #{bilstm_crf_forward.3} parent=1 // pred_check_branch
      %17 = sbr.rel (0) target = $region9
    $region8: #{bilstm_crf_forward.3} parent=1 // pred_region
      _
    $region9: #{bilstm_crf_forward.3} parent=1 // pred_fallthru
      _
    // Predicated region
    $region10: #{bilstm_crf_forward.3} parent=1 // pred_check
      _
    $region11: #{bilstm_crf_forward.3} parent=1 // pred_check_branch
      %19 = sbr.rel (0) target = $region13
    $region12: #{bilstm_crf_forward.3} parent=1 // pred_region
      _
    $region13: #{bilstm_crf_forward.3} parent=1 // pred_fallthru
      _
    // Predicated region
    $region14: #{bilstm_crf_forward.3} parent=1 // pred_check
      _
    $region15: #{bilstm_crf_forward.3} parent=1 // pred_check_branch
      %21 = sbr.rel (0) target = $region17
    $region16: #{bilstm_crf_forward.3} parent=1 // pred_region
      _
    $region17: #{bilstm_crf_forward.3} parent=1 // pred_fallthru
      _
    %v23 = vld [vmem:[%s0] sm:$0xf]
    %v24 = vld [vmem:[%s0 + $0x4] sm:$0xf]
    %v25 = vld [vmem:[%s1] sm:$0xff]
    %v26 = vld [vmem:[%s1 + $0x8] sm:$0xff]
    %v27 = vld [vmem:[%s1 + $0x10] sm:$0xff]
    %v28 = vld [vmem:[%s1 + $0x18] sm:$0xff]
    %v29 = vld [vmem:[%s1 + $0x20] sm:$0xff]
    %v30 = vld [vmem:[%s1 + $0x28] sm:$0xff]
    %v31 = vld [vmem:[%s1 + $0x30] sm:$0xff]
    %v32 = vld [vmem:[%s1 + $0x38] sm:$0xff]
    %v33 = vld [vmem:[%s3] sm:$0x3]
    %v35 = vlaneseq
    %v36 = vshrl.u32 %v35, 7
    %v37 = vsub.s32 0, %v36
    %v38 = vrot.slane %v33, %v37
    %v39 = vlaneseq
    %v40 = vshrl.u32 %v39, 7
    %v41 = vsub.s32 1, %v40
    %v42 = vrot.slane %v33, %v41
    %v47 = vunpack.c.l.b16 %v23
    %v48 = vunpack.c.l.b16 %v24
    %v49 = vpack.c.b16 %v48, %v47
    %v58 = vunpack.c.l.b16 %v25
    %v59 = vunpack.c.h.b16 %v25
    %v60 = vunpack.c.l.b16 %v26
    %v61 = vunpack.c.h.b16 %v26
    %v62 = vunpack.c.l.b16 %v27
    %v63 = vunpack.c.h.b16 %v27
    %v64 = vunpack.c.l.b16 %v28
    %v65 = vunpack.c.h.b16 %v28
    %v66 = vunpack.c.l.b16 %v29
    %v67 = vunpack.c.h.b16 %v29
    %v68 = vunpack.c.l.b16 %v30
    %v69 = vunpack.c.h.b16 %v30
    %v70 = vunpack.c.l.b16 %v31
    %v71 = vunpack.c.h.b16 %v31
    %v72 = vunpack.c.l.b16 %v32
    %v73 = vunpack.c.h.b16 %v32
    %v74 = vpack.c.b16 %v60, %v58
    %v75 = vpack.c.b16 %v61, %v59
    %v76 = vpack.c.b16 %v64, %v62
    %v77 = vpack.c.b16 %v65, %v63
    %v78 = vpack.c.b16 %v68, %v66
    %v79 = vpack.c.b16 %v69, %v67
    %v80 = vpack.c.b16 %v72, %v70
    %v81 = vpack.c.b16 %v73, %v71
    %vm90 = vcmask 523264
    %v92 = vsel %vm90, %v49, 0
    %94 = vmatprep.subr.bf16.mxu0 %v75
    %95 = vmatpush1.bf16.msra.mxu0 %v74
    %96 = vmatprep.subr.bf16.mxu0 %v77
    %97 = vmatpush1.bf16.msra.mxu0 %v76
    %98 = vmatprep.subr.bf16.mxu0 %v79
    %99 = vmatpush1.bf16.msra.mxu0 %v78
    %100 = vmatprep.subr.bf16.mxu0 %v81
    %101 = vmatpush1.bf16.msra.mxu0 %v80
    %102 = vmatprep.subr.bf16.mxu0 0
    %103 = vmatpush1.bf16.msra.mxu0 0
    %104 = vmatprep.subr.bf16.mxu0 0
    %105 = vmatpush1.bf16.msra.mxu0 0
    %106 = vmatprep.subr.bf16.mxu0 0
    %107 = vmatpush1.bf16.msra.mxu0 0
    %108 = vmatprep.subr.bf16.mxu0 0
    %109 = vmatpush1.bf16.msra.mxu0 0
    %110 = vmatprep.subr.bf16.mxu0 0
    %111 = vmatpush1.bf16.msra.mxu0 0
    %112 = vmatprep.subr.bf16.mxu0 0
    %113 = vmatpush1.bf16.msra.mxu0 0
    %114 = vmatprep.subr.bf16.mxu0 0
    %115 = vmatpush1.bf16.msra.mxu0 0
    %116 = vmatprep.subr.bf16.mxu0 0
    %117 = vmatpush1.bf16.msra.mxu0 0
    %118 = vmatprep.subr.bf16.mxu0 0
    %119 = vmatpush1.bf16.msra.mxu0 0
    %120 = vmatprep.subr.bf16.mxu0 0
    %121 = vmatpush1.bf16.msra.mxu0 0
    %122 = vmatprep.subr.bf16.mxu0 0
    %123 = vmatpush1.bf16.msra.mxu0 0
    %124 = vmatprep.subr.bf16.mxu0 0
    %125 = vmatpush1.bf16.msra.mxu0 0
    %126 = vmatprep.mubr.bf16.mxu0 0
    %127 = vmatmul.mubr.bf16.gmra.mrb[0].mxu0 %v92
    %v128 = vpop.f32.mrb[0].mxu0
    %v129 = vadd.f32 %v38, %v128
    %v130 = vpop.f32.mrb[0].mxu0
    %v131 = vadd.f32 %v42, %v130
    %v132 = vpop.f32.mrb[0].mxu0
    %v133 = vadd.f32 %v38, %v132
    %v134 = vpop.f32.mrb[0].mxu0
    %v135 = vadd.f32 %v42, %v134
    %136 = vdwg.mxu0
    %v137 = vld [vmem:[%s2] sm:$0xff]
    %v138 = vld [vmem:[%s2 + $0x8] sm:$0xff]
    %v139 = vld [vmem:[%s2 + $0x10] sm:$0xff]
    %v140 = vld [vmem:[%s2 + $0x18] sm:$0xff]
    %v141 = vld [vmem:[%s2 + $0x20] sm:$0xff]
    %v142 = vld [vmem:[%s2 + $0x28] sm:$0xff]
    %v143 = vld [vmem:[%s2 + $0x30] sm:$0xff]
    %v144 = vld [vmem:[%s2 + $0x38] sm:$0xff]
    %v145 = vlaneseq
    %v146 = vand.u32 %v145, 127
    %v147 = vadd.s32 %v146, 128
    %vm148 = vcmp.lt.s32.totalorder %v146, 0
    %v149 = vsub.s32 0, %v146
    %v150 = vsel %vm148, %v149, %v146
    %v151 = vshrl.u32 %v150, 6
    %v152 = vand.u32 %v150, 63
    %v153 = vsub.s32 0, %v152
    %v154 = vsel %vm148, %v153, %v152
    %vm155 = vcmp.lt.s32.totalorder %v147, 0
    %v156 = vsub.s32 0, %v147
    %v157 = vsel %vm155, %v156, %v147
    %v158 = vshrl.u32 %v157, 6
    %v159 = vand.u32 %v157, 63
    %v160 = vsub.s32 0, %v159
    %v161 = vsel %vm155, %v160, %v159
    %vm162 = vcmp.ne.s32.totalorder %v154, 0
    %vm163 = vcmp.ne.s32.totalorder %v161, 0
    %vm164 = vcmp.lt.s32.totalorder %v154, 0
    %vm165 = vcmp.lt.s32.totalorder %v161, 0
    %vm166 = vmand %vm164, %vm162
    %vm167 = vmand %vm165, %vm163
    %v168 = vadd.s32 %v154, 64
    %v169 = vadd.s32 %v161, 64
    %v170 = vsel %vm166, %v168, %v154
    %v171 = vsel %vm167, %v169, %v161
    %vm172 = vcmp.lt.s32.totalorder %v170, 32
    %vm173 = vcmp.lt.s32.totalorder %v171, 32
    %v174 = vsel %vm172, 1, 0
    %v175 = vsel %vm173, 1, 0
    %vm176 = vcmp.eq.s32.totalorder %v174, 1
    %vm177 = vcmp.eq.s32.totalorder %v175, 1
    %v180 = vrot.slane %v133, 6
    %v181 = vrot.slane %v135, 6
    %v184 = vsel %vm176, %v129, %v180
    %v185 = vsel %vm177, %v131, %v181
    %v186 = vrot.slane %v133, 2
    %v187 = vrot.slane %v135, 2
    %v190 = vsel %vm176, %v129, %v186
    %v191 = vsel %vm177, %v131, %v187
    %v194 = vrot.slane %v129, 6
    %v195 = vrot.slane %v131, 6
    %v198 = vsel %vm176, %v133, %v194
    %v199 = vsel %vm177, %v135, %v195
    %v200 = vrot.slane %v129, 2
    %v201 = vrot.slane %v131, 2
    %v204 = vsel %vm176, %v133, %v200
    %v205 = vsel %vm177, %v135, %v201
    %v214 = vunpack.c.l.b16 %v137
    %v215 = vunpack.c.h.b16 %v137
    %v216 = vunpack.c.l.b16 %v138
    %v217 = vunpack.c.h.b16 %v138
    %v218 = vunpack.c.l.b16 %v139
    %v219 = vunpack.c.h.b16 %v139
    %v220 = vunpack.c.l.b16 %v140
    %v221 = vunpack.c.h.b16 %v140
    %v222 = vunpack.c.l.b16 %v141
    %v223 = vunpack.c.h.b16 %v141
    %v224 = vunpack.c.l.b16 %v142
    %v225 = vunpack.c.h.b16 %v142
    %v226 = vunpack.c.l.b16 %v143
    %v227 = vunpack.c.h.b16 %v143
    %v228 = vunpack.c.l.b16 %v144
    %v229 = vunpack.c.h.b16 %v144
    %v230 = vpack.c.b16 %v216, %v214
    %v231 = vpack.c.b16 %v217, %v215
    %v232 = vpack.c.b16 %v220, %v218
    %v233 = vpack.c.b16 %v221, %v219
    %v234 = vpack.c.b16 %v224, %v222
    %v235 = vpack.c.b16 %v225, %v223
    %v236 = vpack.c.b16 %v228, %v226
    %v237 = vpack.c.b16 %v229, %v227
    %v247 = vsel %vm90, 0, 0
    %249 = vmatprep.subr.bf16.mxu0 %v231
    %250 = vmatpush1.bf16.msra.mxu0 %v230
    %251 = vmatprep.subr.bf16.mxu0 %v233
    %252 = vmatpush1.bf16.msra.mxu0 %v232
    %253 = vmatprep.subr.bf16.mxu0 %v235
    %254 = vmatpush1.bf16.msra.mxu0 %v234
    %255 = vmatprep.subr.bf16.mxu0 %v237
    %256 = vmatpush1.bf16.msra.mxu0 %v236
    %257 = vmatprep.subr.bf16.mxu0 0
    %258 = vmatpush1.bf16.msra.mxu0 0
    %259 = vmatprep.subr.bf16.mxu0 0
    %260 = vmatpush1.bf16.msra.mxu0 0
    %261 = vmatprep.subr.bf16.mxu0 0
    %262 = vmatpush1.bf16.msra.mxu0 0
    %263 = vmatprep.subr.bf16.mxu0 0
    %264 = vmatpush1.bf16.msra.mxu0 0
    %265 = vmatprep.subr.bf16.mxu0 0
    %266 = vmatpush1.bf16.msra.mxu0 0
    %267 = vmatprep.subr.bf16.mxu0 0
    %268 = vmatpush1.bf16.msra.mxu0 0
    %269 = vmatprep.subr.bf16.mxu0 0
    %270 = vmatpush1.bf16.msra.mxu0 0
    %271 = vmatprep.subr.bf16.mxu0 0
    %272 = vmatpush1.bf16.msra.mxu0 0
    %273 = vmatprep.subr.bf16.mxu0 0
    %274 = vmatpush1.bf16.msra.mxu0 0
    %275 = vmatprep.subr.bf16.mxu0 0
    %276 = vmatpush1.bf16.msra.mxu0 0
    %277 = vmatprep.subr.bf16.mxu0 0
    %278 = vmatpush1.bf16.msra.mxu0 0
    %279 = vmatprep.subr.bf16.mxu0 0
    %280 = vmatpush1.bf16.msra.mxu0 0
    %281 = vmatprep.mubr.bf16.mxu0 0
    %282 = vmatmul.mubr.bf16.gmra.mrb[0].mxu0 %v247
    %v283 = vpop.f32.mrb[0].mxu0
    %v284 = vadd.f32 0.0, %v283
    %v285 = vpop.f32.mrb[0].mxu0
    %v286 = vadd.f32 0.0, %v285
    %v287 = vpop.f32.mrb[0].mxu0
    %v288 = vpop.f32.mrb[0].mxu0
    %289 = vdwg.mxu0
    %v290 = vadd.f32 %v184, %v284
    %v291 = vadd.f32 %v185, %v286
    %v292 = vxor.u32 %v290, 2147483648
    %v293 = vxor.u32 %v291, 2147483648
    %v294 = vmul.f32 %v292, 1.442695
    %v295 = vpow.pop %v294
    %v296 = vmul.f32 %v293, 1.442695
    %v297 = vpow.pop %v296
    %v298 = vadd.f32 %v295, 1.0
    %v299 = vadd.f32 %v297, 1.0
    %v300 = vrcp.pop %v298
    %v301 = vmul.f32 1.0, %v300
    %v302 = vrcp.pop %v299
    %v303 = vmul.f32 1.0, %v302
    %v304 = vtanh.pop %v291
    %v305 = vmul.f32 %v301, 0.0
    %v306 = vmul.f32 %v301, %v304
    %308 = vrot.lane.b32.xlu0 %v306, 64
    %v309 = vpop.permute.xlu0 %308
    %v311 = vadd.f32 %v305, %v309
    %v312 = vtanh.pop %v311
    %v313 = vmul.f32 %v303, %v312
    %v314 = vpack.c.bf16 %v313, %v313
    %316 = vrot.lane.b32.xlu0 %v314, 64
    %v317 = vpop.permute.xlu0 %316
    %v319 = vsel %vm90, %v317, 0
    %321 = vmatprep.subr.bf16.mxu0 %v231
    %322 = vmatpush1.bf16.msra.mxu0 %v230
    %323 = vmatprep.subr.bf16.mxu0 %v233
    %324 = vmatpush1.bf16.msra.mxu0 %v232
    %325 = vmatprep.subr.bf16.mxu0 %v235
    %326 = vmatpush1.bf16.msra.mxu0 %v234
    %327 = vmatprep.subr.bf16.mxu0 %v237
    %328 = vmatpush1.bf16.msra.mxu0 %v236
    %329 = vmatprep.subr.bf16.mxu0 0
    %330 = vmatpush1.bf16.msra.mxu0 0
    %331 = vmatprep.subr.bf16.mxu0 0
    %332 = vmatpush1.bf16.msra.mxu0 0
    %333 = vmatprep.subr.bf16.mxu0 0
    %334 = vmatpush1.bf16.msra.mxu0 0
    %335 = vmatprep.subr.bf16.mxu0 0
    %336 = vmatpush1.bf16.msra.mxu0 0
    %337 = vmatprep.subr.bf16.mxu0 0
    %338 = vmatpush1.bf16.msra.mxu0 0
    %339 = vmatprep.subr.bf16.mxu0 0
    %340 = vmatpush1.bf16.msra.mxu0 0
    %341 = vmatprep.subr.bf16.mxu0 0
    %342 = vmatpush1.bf16.msra.mxu0 0
    %343 = vmatprep.subr.bf16.mxu0 0
    %344 = vmatpush1.bf16.msra.mxu0 0
    %345 = vmatprep.subr.bf16.mxu0 0
    %346 = vmatpush1.bf16.msra.mxu0 0
    %347 = vmatprep.subr.bf16.mxu0 0
    %348 = vmatpush1.bf16.msra.mxu0 0
    %349 = vmatprep.subr.bf16.mxu0 0
    %350 = vmatpush1.bf16.msra.mxu0 0
    %351 = vmatprep.subr.bf16.mxu0 0
    %352 = vmatpush1.bf16.msra.mxu0 0
    %353 = vmatprep.mubr.bf16.mxu0 0
    %354 = vmatmul.mubr.bf16.gmra.mrb[0].mxu0 %v319
    %v355 = vpop.f32.mrb[0].mxu0
    %v356 = vadd.f32 0.0, %v355
    %v357 = vpop.f32.mrb[0].mxu0
    %v358 = vadd.f32 0.0, %v357
    %v359 = vpop.f32.mrb[0].mxu0
    %v360 = vpop.f32.mrb[0].mxu0
    %361 = vdwg.mxu0
    %v364 = vrot.slane %v356, 6
    %v365 = vrot.slane %v358, 6
    %v368 = vadd.f32 %v190, %v364
    %v369 = vadd.f32 %v191, %v365
    %v370 = vxor.u32 %v368, 2147483648
    %v371 = vxor.u32 %v369, 2147483648
    %v372 = vmul.f32 %v370, 1.442695
    %v373 = vpow.pop %v372
    %v374 = vmul.f32 %v371, 1.442695
    %v375 = vpow.pop %v374
    %v376 = vadd.f32 %v373, 1.0
    %v377 = vadd.f32 %v375, 1.0
    %v378 = vrcp.pop %v376
    %v379 = vmul.f32 1.0, %v378
    %v380 = vrcp.pop %v377
    %v381 = vmul.f32 1.0, %v380
    %v382 = vtanh.pop %v369
    %v384 = vrot.slane %v311, 6
    %v386 = vmul.f32 %v379, %v384
    %v387 = vmul.f32 %v379, %v382
    %389 = vrot.lane.b32.xlu0 %v387, 64
    %v390 = vpop.permute.xlu0 %389
    %v392 = vadd.f32 %v386, %v390
    %v393 = vtanh.pop %v392
    %v394 = vmul.f32 %v381, %v393
    %v395 = vpack.c.bf16 %v394, %v394
    %v397 = vrot.slane %v395, 1
    %398 = vrot.lane.b32.xlu0 %v397, 64
    %v399 = vpop.permute.xlu0 %398
    %v401 = vsel %vm90, %v399, 0
    %403 = vmatprep.subr.bf16.mxu0 %v231
    %404 = vmatpush1.bf16.msra.mxu0 %v230
    %405 = vmatprep.subr.bf16.mxu0 %v233
    %406 = vmatpush1.bf16.msra.mxu0 %v232
    %407 = vmatprep.subr.bf16.mxu0 %v235
    %408 = vmatpush1.bf16.msra.mxu0 %v234
    %409 = vmatprep.subr.bf16.mxu0 %v237
    %410 = vmatpush1.bf16.msra.mxu0 %v236
    %411 = vmatprep.subr.bf16.mxu0 0
    %412 = vmatpush1.bf16.msra.mxu0 0
    %413 = vmatprep.subr.bf16.mxu0 0
    %414 = vmatpush1.bf16.msra.mxu0 0
    %415 = vmatprep.subr.bf16.mxu0 0
    %416 = vmatpush1.bf16.msra.mxu0 0
    %417 = vmatprep.subr.bf16.mxu0 0
    %418 = vmatpush1.bf16.msra.mxu0 0
    %419 = vmatprep.subr.bf16.mxu0 0
    %420 = vmatpush1.bf16.msra.mxu0 0
    %421 = vmatprep.subr.bf16.mxu0 0
    %422 = vmatpush1.bf16.msra.mxu0 0
    %423 = vmatprep.subr.bf16.mxu0 0
    %424 = vmatpush1.bf16.msra.mxu0 0
    %425 = vmatprep.subr.bf16.mxu0 0
    %426 = vmatpush1.bf16.msra.mxu0 0
    %427 = vmatprep.subr.bf16.mxu0 0
    %428 = vmatpush1.bf16.msra.mxu0 0
    %429 = vmatprep.subr.bf16.mxu0 0
    %430 = vmatpush1.bf16.msra.mxu0 0
    %431 = vmatprep.subr.bf16.mxu0 0
    %432 = vmatpush1.bf16.msra.mxu0 0
    %433 = vmatprep.subr.bf16.mxu0 0
    %434 = vmatpush1.bf16.msra.mxu0 0
    %435 = vmatprep.mubr.bf16.mxu0 0
    %436 = vmatmul.mubr.bf16.gmra.mrb[0].mxu0 %v401
    %v437 = vpop.f32.mrb[0].mxu0
    %v438 = vadd.f32 0.0, %v437
    %v439 = vpop.f32.mrb[0].mxu0
    %v440 = vadd.f32 0.0, %v439
    %v441 = vpop.f32.mrb[0].mxu0
    %v442 = vpop.f32.mrb[0].mxu0
    %443 = vdwg.mxu0
    %v446 = vrot.slane %v438, 4
    %v447 = vrot.slane %v440, 4
    %v450 = vadd.f32 %v184, %v446
    %v451 = vadd.f32 %v185, %v447
    %v452 = vxor.u32 %v450, 2147483648
    %v453 = vxor.u32 %v451, 2147483648
    %v454 = vmul.f32 %v452, 1.442695
    %v455 = vpow.pop %v454
    %v456 = vmul.f32 %v453, 1.442695
    %v457 = vpow.pop %v456
    %v458 = vadd.f32 %v455, 1.0
    %v459 = vadd.f32 %v457, 1.0
    %v460 = vrcp.pop %v458
    %v461 = vmul.f32 1.0, %v460
    %v462 = vrcp.pop %v459
    %v463 = vmul.f32 1.0, %v462
    %v464 = vtanh.pop %v451
    %v466 = vrot.slane %v392, 6
    %v468 = vmul.f32 %v461, %v466
    %v469 = vmul.f32 %v461, %v464
    %471 = vrot.lane.b32.xlu0 %v469, 64
    %v472 = vpop.permute.xlu0 %471
    %v474 = vadd.f32 %v468, %v472
    %v475 = vtanh.pop %v474
    %v476 = vmul.f32 %v463, %v475
    %v477 = vpack.c.bf16 %v476, %v476
    %v479 = vrot.slane %v477, 2
    %480 = vrot.lane.b32.xlu0 %v479, 64
    %v481 = vpop.permute.xlu0 %480
    %v483 = vsel %vm90, %v481, 0
    %485 = vmatprep.subr.bf16.mxu0 %v231
    %486 = vmatpush1.bf16.msra.mxu0 %v230
    %487 = vmatprep.subr.bf16.mxu0 %v233
    %488 = vmatpush1.bf16.msra.mxu0 %v232
    %489 = vmatprep.subr.bf16.mxu0 %v235
    %490 = vmatpush1.bf16.msra.mxu0 %v234
    %491 = vmatprep.subr.bf16.mxu0 %v237
    %492 = vmatpush1.bf16.msra.mxu0 %v236
    %493 = vmatprep.subr.bf16.mxu0 0
    %494 = vmatpush1.bf16.msra.mxu0 0
    %495 = vmatprep.subr.bf16.mxu0 0
    %496 = vmatpush1.bf16.msra.mxu0 0
    %497 = vmatprep.subr.bf16.mxu0 0
    %498 = vmatpush1.bf16.msra.mxu0 0
    %499 = vmatprep.subr.bf16.mxu0 0
    %500 = vmatpush1.bf16.msra.mxu0 0
    %501 = vmatprep.subr.bf16.mxu0 0
    %502 = vmatpush1.bf16.msra.mxu0 0
    %503 = vmatprep.subr.bf16.mxu0 0
    %504 = vmatpush1.bf16.msra.mxu0 0
    %505 = vmatprep.subr.bf16.mxu0 0
    %506 = vmatpush1.bf16.msra.mxu0 0
    %507 = vmatprep.subr.bf16.mxu0 0
    %508 = vmatpush1.bf16.msra.mxu0 0
    %509 = vmatprep.subr.bf16.mxu0 0
    %510 = vmatpush1.bf16.msra.mxu0 0
    %511 = vmatprep.subr.bf16.mxu0 0
    %512 = vmatpush1.bf16.msra.mxu0 0
    %513 = vmatprep.subr.bf16.mxu0 0
    %514 = vmatpush1.bf16.msra.mxu0 0
    %515 = vmatprep.subr.bf16.mxu0 0
    %516 = vmatpush1.bf16.msra.mxu0 0
    %517 = vmatprep.mubr.bf16.mxu0 0
    %518 = vmatmul.mubr.bf16.gmra.mrb[0].mxu0 %v483
    %v519 = vpop.f32.mrb[0].mxu0
    %v520 = vadd.f32 0.0, %v519
    %v521 = vpop.f32.mrb[0].mxu0
    %v522 = vadd.f32 0.0, %v521
    %v523 = vpop.f32.mrb[0].mxu0
    %v524 = vpop.f32.mrb[0].mxu0
    %525 = vdwg.mxu0
    %v528 = vrot.slane %v520, 2
    %v529 = vrot.slane %v522, 2
    %v532 = vadd.f32 %v190, %v528
    %v533 = vadd.f32 %v191, %v529
    %v534 = vxor.u32 %v532, 2147483648
    %v535 = vxor.u32 %v533, 2147483648
    %v536 = vmul.f32 %v534, 1.442695
    %v537 = vpow.pop %v536
    %v538 = vmul.f32 %v535, 1.442695
    %v539 = vpow.pop %v538
    %v540 = vadd.f32 %v537, 1.0
    %v541 = vadd.f32 %v539, 1.0
    %v542 = vrcp.pop %v540
    %v543 = vmul.f32 1.0, %v542
    %v544 = vrcp.pop %v541
    %v545 = vmul.f32 1.0, %v544
    %v546 = vtanh.pop %v533
    %v548 = vrot.slane %v474, 6
    %v550 = vmul.f32 %v543, %v548
    %v551 = vmul.f32 %v543, %v546
    %553 = vrot.lane.b32.xlu0 %v551, 64
    %v554 = vpop.permute.xlu0 %553
    %v556 = vadd.f32 %v550, %v554
    %v557 = vtanh.pop %v556
    %v558 = vmul.f32 %v545, %v557
    %v559 = vpack.c.bf16 %v558, %v558
    %v561 = vrot.slane %v559, 3
    %562 = vrot.lane.b32.xlu0 %v561, 64
    %v563 = vpop.permute.xlu0 %562
    %v565 = vsel %vm90, %v563, 0
    %567 = vmatprep.subr.bf16.mxu0 %v231
    %568 = vmatpush1.bf16.msra.mxu0 %v230
    %569 = vmatprep.subr.bf16.mxu0 %v233
    %570 = vmatpush1.bf16.msra.mxu0 %v232
    %571 = vmatprep.subr.bf16.mxu0 %v235
    %572 = vmatpush1.bf16.msra.mxu0 %v234
    %573 = vmatprep.subr.bf16.mxu0 %v237
    %574 = vmatpush1.bf16.msra.mxu0 %v236
    %575 = vmatprep.subr.bf16.mxu0 0
    %576 = vmatpush1.bf16.msra.mxu0 0
    %577 = vmatprep.subr.bf16.mxu0 0
    %578 = vmatpush1.bf16.msra.mxu0 0
    %579 = vmatprep.subr.bf16.mxu0 0
    %580 = vmatpush1.bf16.msra.mxu0 0
    %581 = vmatprep.subr.bf16.mxu0 0
    %582 = vmatpush1.bf16.msra.mxu0 0
    %583 = vmatprep.subr.bf16.mxu0 0
    %584 = vmatpush1.bf16.msra.mxu0 0
    %585 = vmatprep.subr.bf16.mxu0 0
    %586 = vmatpush1.bf16.msra.mxu0 0
    %587 = vmatprep.subr.bf16.mxu0 0
    %588 = vmatpush1.bf16.msra.mxu0 0
    %589 = vmatprep.subr.bf16.mxu0 0
    %590 = vmatpush1.bf16.msra.mxu0 0
    %591 = vmatprep.subr.bf16.mxu0 0
    %592 = vmatpush1.bf16.msra.mxu0 0
    %593 = vmatprep.subr.bf16.mxu0 0
    %594 = vmatpush1.bf16.msra.mxu0 0
    %595 = vmatprep.subr.bf16.mxu0 0
    %596 = vmatpush1.bf16.msra.mxu0 0
    %597 = vmatprep.subr.bf16.mxu0 0
    %598 = vmatpush1.bf16.msra.mxu0 0
    %599 = vmatprep.mubr.bf16.mxu0 0
    %600 = vmatmul.mubr.bf16.gmra.mrb[0].mxu0 %v565
    %v601 = vpop.f32.mrb[0].mxu0
    %v602 = vadd.f32 0.0, %v601
    %v603 = vpop.f32.mrb[0].mxu0
    %v604 = vadd.f32 0.0, %v603
    %v605 = vpop.f32.mrb[0].mxu0
    %v606 = vpop.f32.mrb[0].mxu0
    %607 = vdwg.mxu0
    %v608 = vadd.f32 %v198, %v602
    %v609 = vadd.f32 %v199, %v604
    %v610 = vxor.u32 %v608, 2147483648
    %v611 = vxor.u32 %v609, 2147483648
    %v612 = vmul.f32 %v610, 1.442695
    %v613 = vpow.pop %v612
    %v614 = vmul.f32 %v611, 1.442695
    %v615 = vpow.pop %v614
    %v616 = vadd.f32 %v613, 1.0
    %v617 = vadd.f32 %v615, 1.0
    %v618 = vrcp.pop %v616
    %v619 = vmul.f32 1.0, %v618
    %v620 = vrcp.pop %v617
    %v621 = vmul.f32 1.0, %v620
    %v622 = vtanh.pop %v609
    %v624 = vrot.slane %v556, 6
    %v626 = vmul.f32 %v619, %v624
    %v627 = vmul.f32 %v619, %v622
    %629 = vrot.lane.b32.xlu0 %v627, 64
    %v630 = vpop.permute.xlu0 %629
    %v632 = vadd.f32 %v626, %v630
    %v633 = vtanh.pop %v632
    %v634 = vmul.f32 %v621, %v633
    %v635 = vpack.c.bf16 %v634, %v634
    %637 = vrot.lane.b32.xlu0 %v635, 64
    %v638 = vpop.permute.xlu0 %637
    %v640 = vsel %vm90, %v638, 0
    %642 = vmatprep.subr.bf16.mxu0 %v231
    %643 = vmatpush1.bf16.msra.mxu0 %v230
    %644 = vmatprep.subr.bf16.mxu0 %v233
    %645 = vmatpush1.bf16.msra.mxu0 %v232
    %646 = vmatprep.subr.bf16.mxu0 %v235
    %647 = vmatpush1.bf16.msra.mxu0 %v234
    %648 = vmatprep.subr.bf16.mxu0 %v237
    %649 = vmatpush1.bf16.msra.mxu0 %v236
    %650 = vmatprep.subr.bf16.mxu0 0
    %651 = vmatpush1.bf16.msra.mxu0 0
    %652 = vmatprep.subr.bf16.mxu0 0
    %653 = vmatpush1.bf16.msra.mxu0 0
    %654 = vmatprep.subr.bf16.mxu0 0
    %655 = vmatpush1.bf16.msra.mxu0 0
    %656 = vmatprep.subr.bf16.mxu0 0
    %657 = vmatpush1.bf16.msra.mxu0 0
    %658 = vmatprep.subr.bf16.mxu0 0
    %659 = vmatpush1.bf16.msra.mxu0 0
    %660 = vmatprep.subr.bf16.mxu0 0
    %661 = vmatpush1.bf16.msra.mxu0 0
    %662 = vmatprep.subr.bf16.mxu0 0
    %663 = vmatpush1.bf16.msra.mxu0 0
    %664 = vmatprep.subr.bf16.mxu0 0
    %665 = vmatpush1.bf16.msra.mxu0 0
    %666 = vmatprep.subr.bf16.mxu0 0
    %667 = vmatpush1.bf16.msra.mxu0 0
    %668 = vmatprep.subr.bf16.mxu0 0
    %669 = vmatpush1.bf16.msra.mxu0 0
    %670 = vmatprep.subr.bf16.mxu0 0
    %671 = vmatpush1.bf16.msra.mxu0 0
    %672 = vmatprep.subr.bf16.mxu0 0
    %673 = vmatpush1.bf16.msra.mxu0 0
    %674 = vmatprep.mubr.bf16.mxu0 0
    %675 = vmatmul.mubr.bf16.gmra.mrb[0].mxu0 %v640
    %v676 = vpop.f32.mrb[0].mxu0
    %v677 = vadd.f32 0.0, %v676
    %v678 = vpop.f32.mrb[0].mxu0
    %v679 = vadd.f32 0.0, %v678
    %v680 = vpop.f32.mrb[0].mxu0
    %v681 = vpop.f32.mrb[0].mxu0
    %682 = vdwg.mxu0
    %v685 = vrot.slane %v677, 6
    %v686 = vrot.slane %v679, 6
    %v689 = vadd.f32 %v204, %v685
    %v690 = vadd.f32 %v205, %v686
    %v691 = vxor.u32 %v689, 2147483648
    %v692 = vxor.u32 %v690, 2147483648
    %v693 = vmul.f32 %v691, 1.442695
    %v694 = vpow.pop %v693
    %v695 = vmul.f32 %v692, 1.442695
    %v696 = vpow.pop %v695
    %v697 = vadd.f32 %v694, 1.0
    %v698 = vadd.f32 %v696, 1.0
    %v699 = vrcp.pop %v697
    %v700 = vmul.f32 1.0, %v699
    %v701 = vrcp.pop %v698
    %v702 = vmul.f32 1.0, %v701
    %v703 = vtanh.pop %v690
    %v705 = vrot.slane %v632, 6
    %v707 = vmul.f32 %v700, %v705
    %v708 = vmul.f32 %v700, %v703
    %710 = vrot.lane.b32.xlu0 %v708, 64
    %v711 = vpop.permute.xlu0 %710
    %v713 = vadd.f32 %v707, %v711
    %v714 = vtanh.pop %v713
    %v715 = vmul.f32 %v702, %v714
    %v716 = vpack.c.bf16 %v715, %v715
    %v718 = vrot.slane %v716, 1
    %719 = vrot.lane.b32.xlu0 %v718, 64
    %v720 = vpop.permute.xlu0 %719
    %v722 = vsel %vm90, %v720, 0
    %724 = vmatprep.subr.bf16.mxu0 %v231
    %725 = vmatpush1.bf16.msra.mxu0 %v230
    %726 = vmatprep.subr.bf16.mxu0 %v233
    %727 = vmatpush1.bf16.msra.mxu0 %v232
    %728 = vmatprep.subr.bf16.mxu0 %v235
    %729 = vmatpush1.bf16.msra.mxu0 %v234
    %730 = vmatprep.subr.bf16.mxu0 %v237
    %731 = vmatpush1.bf16.msra.mxu0 %v236
    %732 = vmatprep.subr.bf16.mxu0 0
    %733 = vmatpush1.bf16.msra.mxu0 0
    %734 = vmatprep.subr.bf16.mxu0 0
    %735 = vmatpush1.bf16.msra.mxu0 0
    %736 = vmatprep.subr.bf16.mxu0 0
    %737 = vmatpush1.bf16.msra.mxu0 0
    %738 = vmatprep.subr.bf16.mxu0 0
    %739 = vmatpush1.bf16.msra.mxu0 0
    %740 = vmatprep.subr.bf16.mxu0 0
    %741 = vmatpush1.bf16.msra.mxu0 0
    %742 = vmatprep.subr.bf16.mxu0 0
    %743 = vmatpush1.bf16.msra.mxu0 0
    %744 = vmatprep.subr.bf16.mxu0 0
    %745 = vmatpush1.bf16.msra.mxu0 0
    %746 = vmatprep.subr.bf16.mxu0 0
    %747 = vmatpush1.bf16.msra.mxu0 0
    %748 = vmatprep.subr.bf16.mxu0 0
    %749 = vmatpush1.bf16.msra.mxu0 0
    %750 = vmatprep.subr.bf16.mxu0 0
    %751 = vmatpush1.bf16.msra.mxu0 0
    %752 = vmatprep.subr.bf16.mxu0 0
    %753 = vmatpush1.bf16.msra.mxu0 0
    %754 = vmatprep.subr.bf16.mxu0 0
    %755 = vmatpush1.bf16.msra.mxu0 0
    %756 = vmatprep.mubr.bf16.mxu0 0
    %757 = vmatmul.mubr.bf16.gmra.mrb[0].mxu0 %v722
    %v758 = vpop.f32.mrb[0].mxu0
    %v759 = vadd.f32 0.0, %v758
    %v760 = vpop.f32.mrb[0].mxu0
    %v761 = vadd.f32 0.0, %v760
    %v762 = vpop.f32.mrb[0].mxu0
    %v763 = vpop.f32.mrb[0].mxu0
    %764 = vdwg.mxu0
    %v767 = vrot.slane %v759, 4
    %v768 = vrot.slane %v761, 4
    %v771 = vadd.f32 %v198, %v767
    %v772 = vadd.f32 %v199, %v768
    %v773 = vxor.u32 %v771, 2147483648
    %v774 = vxor.u32 %v772, 2147483648
    %v775 = vmul.f32 %v773, 1.442695
    %v776 = vpow.pop %v775
    %v777 = vmul.f32 %v774, 1.442695
    %v778 = vpow.pop %v777
    %v779 = vadd.f32 %v776, 1.0
    %v780 = vadd.f32 %v778, 1.0
    %v781 = vrcp.pop %v779
    %v782 = vmul.f32 1.0, %v781
    %v783 = vrcp.pop %v780
    %v784 = vmul.f32 1.0, %v783
    %v785 = vtanh.pop %v772
    %v787 = vrot.slane %v713, 6
    %v789 = vmul.f32 %v782, %v787
    %v790 = vmul.f32 %v782, %v785
    %792 = vrot.lane.b32.xlu0 %v790, 64
    %v793 = vpop.permute.xlu0 %792
    %v795 = vadd.f32 %v789, %v793
    %v796 = vtanh.pop %v795
    %v797 = vmul.f32 %v784, %v796
    %v798 = vpack.c.bf16 %v797, %v797
    %v800 = vrot.slane %v798, 2
    %801 = vrot.lane.b32.xlu0 %v800, 64
    %v802 = vpop.permute.xlu0 %801
    %v804 = vsel %vm90, %v802, 0
    %806 = vmatprep.subr.bf16.mxu0 %v231
    %807 = vmatpush1.bf16.msra.mxu0 %v230
    %808 = vmatprep.subr.bf16.mxu0 %v233
    %809 = vmatpush1.bf16.msra.mxu0 %v232
    %810 = vmatprep.subr.bf16.mxu0 %v235
    %811 = vmatpush1.bf16.msra.mxu0 %v234
    %812 = vmatprep.subr.bf16.mxu0 %v237
    %813 = vmatpush1.bf16.msra.mxu0 %v236
    %814 = vmatprep.subr.bf16.mxu0 0
    %815 = vmatpush1.bf16.msra.mxu0 0
    %816 = vmatprep.subr.bf16.mxu0 0
    %817 = vmatpush1.bf16.msra.mxu0 0
    %818 = vmatprep.subr.bf16.mxu0 0
    %819 = vmatpush1.bf16.msra.mxu0 0
    %820 = vmatprep.subr.bf16.mxu0 0
    %821 = vmatpush1.bf16.msra.mxu0 0
    %822 = vmatprep.subr.bf16.mxu0 0
    %823 = vmatpush1.bf16.msra.mxu0 0
    %824 = vmatprep.subr.bf16.mxu0 0
    %825 = vmatpush1.bf16.msra.mxu0 0
    %826 = vmatprep.subr.bf16.mxu0 0
    %827 = vmatpush1.bf16.msra.mxu0 0
    %828 = vmatprep.subr.bf16.mxu0 0
    %829 = vmatpush1.bf16.msra.mxu0 0
    %830 = vmatprep.subr.bf16.mxu0 0
    %831 = vmatpush1.bf16.msra.mxu0 0
    %832 = vmatprep.subr.bf16.mxu0 0
    %833 = vmatpush1.bf16.msra.mxu0 0
    %834 = vmatprep.subr.bf16.mxu0 0
    %835 = vmatpush1.bf16.msra.mxu0 0
    %836 = vmatprep.subr.bf16.mxu0 0
    %837 = vmatpush1.bf16.msra.mxu0 0
    %838 = vmatprep.mubr.bf16.mxu0 0
    %839 = vmatmul.mubr.bf16.gmra.mrb[0].mxu0 %v804
    %v840 = vpop.f32.mrb[0].mxu0
    %v841 = vadd.f32 0.0, %v840
    %v842 = vpop.f32.mrb[0].mxu0
    %v843 = vadd.f32 0.0, %v842
    %v844 = vpop.f32.mrb[0].mxu0
    %v845 = vpop.f32.mrb[0].mxu0
    %846 = vdwg.mxu0
    %v849 = vrot.slane %v841, 2
    %v850 = vrot.slane %v843, 2
    %v853 = vadd.f32 %v204, %v849
    %v854 = vadd.f32 %v205, %v850
    %v855 = vxor.u32 %v853, 2147483648
    %v856 = vxor.u32 %v854, 2147483648
    %v857 = vmul.f32 %v855, 1.442695
    %v858 = vpow.pop %v857
    %v859 = vmul.f32 %v856, 1.442695
    %v860 = vpow.pop %v859
    %v861 = vadd.f32 %v858, 1.0
    %v862 = vadd.f32 %v860, 1.0
    %v863 = vrcp.pop %v861
    %v864 = vmul.f32 1.0, %v863
    %v865 = vrcp.pop %v862
    %v866 = vmul.f32 1.0, %v865
    %v867 = vtanh.pop %v854
    %v869 = vrot.slane %v795, 6
    %v871 = vmul.f32 %v864, %v869
    %v872 = vmul.f32 %v864, %v867
    %874 = vrot.lane.b32.xlu0 %v872, 64
    %v875 = vpop.permute.xlu0 %874
    %v877 = vadd.f32 %v871, %v875
    %v878 = vtanh.pop %v877
    %v879 = vmul.f32 %v866, %v878
    %881 = vrot.lane.b32.xlu0 %v313, 64
    %v882 = vpop.permute.xlu0 %881
    %v885 = vrot.slane %v879, 6
    %886 = vrot.lane.b32.xlu0 %v885, 64
    %v887 = vpop.permute.xlu0 %886
    %vm889 = vcmask 261120
    %v890 = vsel %vm889, %v882, %v887
    %892 = vrot.lane.b32.xlu0 %v394, 64
    %v893 = vpop.permute.xlu0 %892
    %v896 = vrot.slane %v797, 2
    %897 = vrot.lane.b32.xlu0 %v896, 64
    %v898 = vpop.permute.xlu0 %897
    %v900 = vsel %vm889, %v893, %v898
    %902 = vrot.lane.b32.xlu0 %v476, 64
    %v903 = vpop.permute.xlu0 %902
    %v906 = vrot.slane %v715, 6
    %907 = vrot.lane.b32.xlu0 %v906, 64
    %v908 = vpop.permute.xlu0 %907
    %v910 = vsel %vm889, %v903, %v908
    %912 = vrot.lane.b32.xlu0 %v558, 64
    %v913 = vpop.permute.xlu0 %912
    %v916 = vrot.slane %v634, 2
    %917 = vrot.lane.b32.xlu0 %v916, 64
    %v918 = vpop.permute.xlu0 %917
    %v920 = vsel %vm889, %v913, %v918
    %921 = vrot.lane.b32.xlu0 %v634, 64
    %v922 = vpop.permute.xlu0 %921
    %v924 = vrot.slane %v558, 6
    %925 = vrot.lane.b32.xlu0 %v924, 64
    %v926 = vpop.permute.xlu0 %925
    %v928 = vsel %vm889, %v922, %v926
    %929 = vrot.lane.b32.xlu0 %v715, 64
    %v930 = vpop.permute.xlu0 %929
    %v932 = vrot.slane %v476, 2
    %933 = vrot.lane.b32.xlu0 %v932, 64
    %v934 = vpop.permute.xlu0 %933
    %v936 = vsel %vm889, %v930, %v934
    %937 = vrot.lane.b32.xlu0 %v797, 64
    %v938 = vpop.permute.xlu0 %937
    %v940 = vrot.slane %v394, 6
    %941 = vrot.lane.b32.xlu0 %v940, 64
    %v942 = vpop.permute.xlu0 %941
    %v944 = vsel %vm889, %v938, %v942
    %945 = vrot.lane.b32.xlu0 %v879, 64
    %v946 = vpop.permute.xlu0 %945
    %v948 = vrot.slane %v313, 2
    %949 = vrot.lane.b32.xlu0 %v948, 64
    %v950 = vpop.permute.xlu0 %949
    %v952 = vsel %vm889, %v946, %v950
    %v954 = vrot.slane %v900, 2
    %955 = vrot.lane.b32.xlu0 %v954, 64
    %v956 = vpop.permute.xlu0 %955
    %v959 = vrot.slane %v910, 4
    %v962 = vrot.slane %v920, 6
    %963 = vrot.lane.b32.xlu0 %v962, 64
    %v964 = vpop.permute.xlu0 %963
    %v967 = vrot.slane %v936, 2
    %968 = vrot.lane.b32.xlu0 %v967, 64
    %v969 = vpop.permute.xlu0 %968
    %v972 = vrot.slane %v944, 4
    %v975 = vrot.slane %v952, 6
    %976 = vrot.lane.b32.xlu0 %v975, 64
    %v977 = vpop.permute.xlu0 %976
    %v979 = vsel %vm90, %v890, %v956
    %v980 = vsel %vm90, %v959, %v964
    %v981 = vsel %vm90, %v928, %v969
    %v982 = vsel %vm90, %v972, %v977
    %v987 = vcombine.low %v979, %v980
    %v988 = vcombine.low %v981, %v982
    %v990 = vunpack.c.l.s4 1983009808
    %v991 = vunpack.c.0.s8 %v990
    %v992 = vlaneseq
    %v993 = vshrl.u32 %v992, 7
    %v994 = vsub.s32 %v991, %v993
    %v995 = vrot.slane %v987, %v994
    %v997 = vunpack.c.l.s4 1983009808
    %v998 = vunpack.c.0.s8 %v997
    %v999 = vlaneseq
    %v1000 = vshrl.u32 %v999, 7
    %v1001 = vsub.s32 %v998, %v1000
    %v1002 = vrot.slane %v988, %v1001
    %v1003 = vcombine.low %v995, %v1002
    %1005 = vst [vmem:[%s4] sm:$0xff] %v1003
    %v1007 = vrot.slane %v890, 6
    %vm1009 = vcmp.gt.f32.partialorder %v900, %v1007
    %v1010 = vsel %vm1009, %v900, %v1007
    %v1011 = vsel %vm1009, 1, 0
    %v1013 = vrot.slane %v1010, 6
    %vm1015 = vcmp.gt.f32.partialorder %v910, %v1013
    %v1016 = vsel %vm1015, %v910, %v1013
    %v1017 = vrot.slane %v1011, 6
    %v1018 = vsel %vm1015, 2, %v1017
    %v1020 = vrot.slane %v1016, 6
    %vm1022 = vcmp.gt.f32.partialorder %v920, %v1020
    %v1023 = vsel %vm1022, %v920, %v1020
    %v1024 = vrot.slane %v1018, 6
    %v1025 = vsel %vm1022, 3, %v1024
    %v1027 = vrot.slane %v1023, 6
    %vm1029 = vcmp.gt.f32.partialorder %v928, %v1027
    %v1030 = vsel %vm1029, %v928, %v1027
    %v1031 = vrot.slane %v1025, 6
    %v1032 = vsel %vm1029, 4, %v1031
    %v1034 = vrot.slane %v1030, 6
    %vm1036 = vcmp.gt.f32.partialorder %v936, %v1034
    %v1037 = vsel %vm1036, %v936, %v1034
    %v1038 = vrot.slane %v1032, 6
    %v1039 = vsel %vm1036, 5, %v1038
    %v1041 = vrot.slane %v1037, 6
    %vm1043 = vcmp.gt.f32.partialorder %v944, %v1041
    %v1044 = vsel %vm1043, %v944, %v1041
    %v1045 = vrot.slane %v1039, 6
    %v1046 = vsel %vm1043, 6, %v1045
    %v1048 = vrot.slane %v1044, 6
    %vm1050 = vcmp.gt.f32.partialorder %v952, %v1048
    %v1051 = vsel %vm1050, %v952, %v1048
    %v1052 = vrot.slane %v1046, 6
    %v1053 = vsel %vm1050, 7, %v1052
    %vm1054 = vcmask 523270
    %1055 = vst.msk [vmem:[#allocation2 - $0x6] sm:$0xc0] %vm1054, %v1051
    %1056 = vst.msk [vmem:[#allocation4 - $0x6] sm:$0xc0] %vm1054, %v1053
    // Predicated region
    $region18: #{bilstm_crf_forward.3} parent=1 // pred_check
      _
    $region19: #{bilstm_crf_forward.3} parent=1 // pred_check_branch
      %1058 = sbr.rel (0) target = $region21
    $region20: #{bilstm_crf_forward.3} parent=1 // pred_region
      _
    $region21: #{bilstm_crf_forward.3} parent=1 // pred_fallthru
      _
    // Predicated region
    $region22: #{bilstm_crf_forward.3} parent=1 // pred_check
      _
    $region23: #{bilstm_crf_forward.3} parent=1 // pred_check_branch
      %1060 = sbr.rel (0) target = $region25
    $region24: #{bilstm_crf_forward.3} parent=1 // pred_region
      %s1062 = ssub.s32 32, 32
      %1063 = vsyncadd [#allocation3], %s1062
      %s1065 = sshll.u32 [#allocation2], 4
      %s1066 = int_to_ptr.vmem [resolvable:$true] %s1065
      %1068 = dma.vmem_to_hbm [thread:$0]  %s1066, 32, %s5, [#allocation3]
    $region25: #{bilstm_crf_forward.3} parent=1 // pred_fallthru
      _
    // Predicated region
    $region26: #{bilstm_crf_forward.3} parent=1 // pred_check
      _
    $region27: #{bilstm_crf_forward.3} parent=1 // pred_check_branch
      %1070 = sbr.rel (0) target = $region29
    $region28: #{bilstm_crf_forward.3} parent=1 // pred_region
      %s1072 = ssub.s32 32, 32
      %1073 = vsyncadd [#allocation5], %s1072
      %s1075 = sshll.u32 [#allocation4], 4
      %s1076 = int_to_ptr.vmem [resolvable:$true] %s1075
      %1078 = dma.vmem_to_hbm [thread:$0]  %s1076, 32, %s6, [#allocation5]
    $region29: #{bilstm_crf_forward.3} parent=1 // pred_fallthru
      _
    // Predicated region
    $region30: #{bilstm_crf_forward.3} parent=1 // pred_check
      _
    $region31: #{bilstm_crf_forward.3} parent=1 // pred_check_branch
      %1080 = sbr.rel (0) target = $region33
    $region32: #{bilstm_crf_forward.3} parent=1 // pred_region
      _
    $region33: #{bilstm_crf_forward.3} parent=1 // pred_fallthru
      _
    // Predicated region
    $region34: #{bilstm_crf_forward.3} parent=1 // pred_check
      _
    $region35: #{bilstm_crf_forward.3} parent=1 // pred_check_branch
      %1082 = sbr.rel (0) target = $region37
    $region36: #{bilstm_crf_forward.3} parent=1 // pred_region
      %1083 = dma.done [#allocation3], 32
    $region37: #{bilstm_crf_forward.3} parent=1 // pred_fallthru
      _
    // Predicated region
    $region38: #{bilstm_crf_forward.3} parent=1 // pred_check
      _
    $region39: #{bilstm_crf_forward.3} parent=1 // pred_check_branch
      %1085 = sbr.rel (0) target = $region41
    $region40: #{bilstm_crf_forward.3} parent=1 // pred_region
      %1086 = dma.done [#allocation5], 32
    $region41: #{bilstm_crf_forward.3} parent=1 // pred_fallthru
      _
    %1087 = vsyncpa [#allocation3], 1
    %1088 = vsyncpa [#allocation5], 1

</llo_original>
